<compile_context>
chip_gen: v5e
topology: v5e:2x2
jax: 0.10.0
libtpu: 0.0.40
codegen_flags: <defaults>
</compile_context>

<pallas_src>
import functools

import jax
import jax.numpy as jnp
from jax.experimental import pallas as pl
from jax.experimental.pallas import tpu as pltpu


# --------------------------------------------------------------------------
# Fused attention kernel: x block (bt, n, dim) -> out block (bt, n, dim)
# --------------------------------------------------------------------------
def _fused_attention_kernel(x_ref, wqkv_ref, wout_ref, bout_ref, o_ref, *,
                            heads, head_dim, scale, project_out):
    bt, n, dim = x_ref.shape
    inner = heads * head_dim

    # ---- QKV projection: (bt*n, dim) @ (dim, 3*inner), bf16 in / f32 acc ----
    x2 = x_ref[...].reshape(bt * n, dim)                       # bf16
    qkv = jnp.dot(x2, wqkv_ref[...], preferred_element_type=jnp.float32)
    qkv = qkv.reshape(bt, n, 3 * inner)                        # f32
    q = qkv[:, :, 0 * inner:1 * inner]
    k = qkv[:, :, 1 * inner:2 * inner]
    v = qkv[:, :, 2 * inner:3 * inner]

    # ---- per-head softmax(QK^T)V; bf16 MXU inputs, f32 softmax math ----
    head_outs = []
    for h in range(heads):                                     # static unroll
        sl = slice(h * head_dim, (h + 1) * head_dim)
        qh = q[:, :, sl].astype(jnp.bfloat16)
        kh = k[:, :, sl].astype(jnp.bfloat16)
        vh = v[:, :, sl].astype(jnp.bfloat16)
        s = jnp.einsum("bnd,bmd->bnm", qh, kh,
                       preferred_element_type=jnp.float32) * scale
        s = s - jnp.max(s, axis=-1, keepdims=True)
        e = jnp.exp(s)
        p = e * pl.reciprocal(jnp.sum(e, axis=-1, keepdims=True), approx=True)
        head_outs.append(
            jnp.einsum("bnm,bmd->bnd", p.astype(jnp.bfloat16), vh,
                       preferred_element_type=jnp.float32))
    attn_out = jnp.concatenate(head_outs, axis=-1)             # (bt, n, inner) f32

    if project_out:
        # ---- output projection: (bt*n, inner) @ (inner, dim) + bias ----
        a2 = attn_out.reshape(bt * n, inner).astype(jnp.bfloat16)
        out = jnp.dot(a2, wout_ref[...], preferred_element_type=jnp.float32)
        out = out + bout_ref[...]                              # (1, dim) f32 bias
        o_ref[...] = out.reshape(bt, n, dim).astype(o_ref.dtype)
    else:
        # heads == 1 and head_dim == dim  ->  to_out is Identity
        o_ref[...] = attn_out.astype(o_ref.dtype)


def _pick_seq_block(bp, n, row_budget=512):
    """Largest divisor bt of bp with bt*n <= row_budget; keep grid >= 2."""
    cap = bp if bp < 2 else bp // 2
    best = 1
    for bt in range(1, cap + 1):
        if bp % bt == 0 and bt * n <= row_budget:
            best = bt
    return best


def attention_forward(x, params, *, heads, head_dim):
    """x: (b, p, n, dim) f32.  params: pre-transposed, pre-cast weights."""
    b, p, n, dim = x.shape
    inner = heads * head_dim
    project_out = not (heads == 1 and head_dim == dim)

    bp = b * p
    bt = _pick_seq_block(bp, n)
    grid = bp // bt

    x_flat = x.reshape(bp, n, dim).astype(jnp.bfloat16)        # halve input DMA

    m_rows = bp * n
    flops = (2 * m_rows * dim * 3 * inner                      # qkv projection
             + 2 * bp * heads * n * n * head_dim * 2           # QK^T and PV
             + (2 * m_rows * inner * dim if project_out else 0))
    bytes_accessed = (x_flat.size * 2 + params["wqkv"].size * 2
                      + params["wout"].size * 2 + params["bout"].size * 4
                      + m_rows * dim * 4)

    kernel = functools.partial(
        _fused_attention_kernel, heads=heads, head_dim=head_dim,
        scale=head_dim ** -0.5, project_out=project_out)

    out = pl.pallas_call(
        kernel,
        out_shape=jax.ShapeDtypeStruct((bp, n, dim), jnp.float32),
        grid=(grid,),
        in_specs=[
            pl.BlockSpec((bt, n, dim), lambda i: (i, 0, 0)),    # x block
            pl.BlockSpec((dim, 3 * inner), lambda i: (0, 0)),   # W_qkv (resident)
            pl.BlockSpec((inner, dim), lambda i: (0, 0)),       # W_out (resident)
            pl.BlockSpec((1, dim), lambda i: (0, 0)),           # b_out
        ],
        out_specs=pl.BlockSpec((bt, n, dim), lambda i: (i, 0, 0)),
        compiler_params=pltpu.CompilerParams(
            dimension_semantics=("parallel",)),
        cost_estimate=pl.CostEstimate(
            flops=flops,
            transcendentals=bp * heads * n * n,
            bytes_accessed=bytes_accessed),
    )(x_flat, params["wqkv"], params["wout"], params["bout"])
    return out.reshape(b, p, n, dim)


# --------------------------------------------------------------------------
# Parameter init (weights pre-transposed to (in, out) layout, pre-cast once)
# --------------------------------------------------------------------------
def init_attention_params(key, dim, heads, head_dim):
    inner = heads * head_dim
    k1, k2, k3 = jax.random.split(key, 3)
    wqkv = jax.random.normal(k1, (dim, 3 * inner), jnp.float32) * (dim ** -0.5)
    wout = jax.random.normal(k2, (inner, dim), jnp.float32) * (inner ** -0.5)
    bout = jax.random.normal(k3, (dim,), jnp.float32) * 0.01
    params_f32 = dict(wqkv=wqkv, wout=wout, bout=bout)         # f32 reference copy
    params_dev = dict(                                         # kernel copy
        wqkv=wqkv.astype(jnp.bfloat16),
        wout=wout.astype(jnp.bfloat16),
        bout=bout.reshape(1, dim),                             # bias stays f32
    )
    return params_f32, params_dev


# --------------------------------------------------------------------------
# Pure-JAX f32 reference (mirrors the PyTorch forward; dropout = identity)
# --------------------------------------------------------------------------
def attention_reference(x, params, *, heads, head_dim):
    b, p, n, dim = x.shape
    inner = heads * head_dim
    qkv = jnp.einsum("bpnd,de->bpne", x, params["wqkv"])
    q, k, v = jnp.split(qkv, 3, axis=-1)

    def split_heads(t):
        return t.reshape(b, p, n, heads, head_dim).transpose(0, 1, 3, 2, 4)

    q, k, v = map(split_heads, (q, k, v))
    dots = jnp.einsum("bphnd,bphmd->bphnm", q, k) * (head_dim ** -0.5)
    attn = jax.nn.softmax(dots, axis=-1)
    out = jnp.einsum("bphnm,bphmd->bphnd", attn, v)
    out = out.transpose(0, 1, 3, 2, 4).reshape(b, p, n, inner)
    return out @ params["wout"] + params["bout"]


# --------------------------------------------------------------------------
if __name__ == "__main__":
    # Small, lane-aligned shapes consistent with the module
    # (MobileViT uses dim=512, heads=8, head_dim=64; scaled down here).
    dim, heads, head_dim = 128, 4, 32
    b, p, n = 2, 4, 16

    key = jax.random.PRNGKey(0)
    kx, kp = jax.random.split(key)
    x = jax.random.normal(kx, (b, p, n, dim), jnp.float32)
    ref_params, dev_params = init_attention_params(kp, dim, heads, head_dim)

    fwd = jax.jit(functools.partial(attention_forward,
                                    heads=heads, head_dim=head_dim))
    out = fwd(x, dev_params)
    jax.block_until_ready(out)

    assert out.shape == (b, p, n, dim), out.shape
    assert bool(jnp.all(jnp.isfinite(out)))

    ref = attention_reference(x, ref_params, heads=heads, head_dim=head_dim)
    max_err = float(jnp.max(jnp.abs(out - ref)))
    assert max_err < 2e-1, f"max abs err {max_err}"   # bf16-MXU vs f32 reference

    print("KERNEL_OK")
</pallas_src>

<mosaic_0001>
module attributes {stable_mosaic.version = 11 : i64} {
  func.func @_fused_attention_kernel(%arg0: i32, %arg1: memref<4x16x128xbf16, #tpu.memory_space<vmem>>, %arg2: memref<128x384xbf16, #tpu.memory_space<vmem>>, %arg3: memref<128x128xbf16, #tpu.memory_space<vmem>>, %arg4: memref<1x128xf32, #tpu.memory_space<vmem>>, %arg5: memref<4x16x128xf32, #tpu.memory_space<vmem>>) attributes {dimension_semantics = [#tpu.dimension_semantics<parallel>], iteration_bounds = array<i64: 2>, scalar_prefetch = 0 : i64, scratch_operands = 0 : i64, tpu.core_type = #tpu.core_type<tc>, window_params = [{transform_indices = @transform_0, window_bounds = array<i64: 4, 16, 128>}, {pipeline_mode = #tpu.pipeline_mode<synchronous>, transform_indices = @transform_1, window_bounds = array<i64: 128, 384>}, {pipeline_mode = #tpu.pipeline_mode<synchronous>, transform_indices = @transform_2, window_bounds = array<i64: 128, 128>}, {pipeline_mode = #tpu.pipeline_mode<synchronous>, transform_indices = @transform_3, window_bounds = array<i64: 1, 128>}, {transform_indices = @transform_4, window_bounds = array<i64: 4, 16, 128>}]} {
    %c0 = arith.constant 0 : index
    %c0_0 = arith.constant 0 : index
    %c0_1 = arith.constant 0 : index
    %0 = vector.load %arg1[%c0, %c0_0, %c0_1] : memref<4x16x128xbf16, #tpu.memory_space<vmem>>, vector<4x16x128xbf16>
    %1 = vector.shape_cast %0 : vector<4x16x128xbf16> to vector<64x128xbf16>
    %c0_2 = arith.constant 0 : index
    %c0_3 = arith.constant 0 : index
    %2 = vector.load %arg2[%c0_2, %c0_3] : memref<128x384xbf16, #tpu.memory_space<vmem>>, vector<128x384xbf16>
    %cst = arith.constant dense<0.000000e+00> : vector<64x384xf32>
    %3 = tpu.matmul %1, %2, %cst {dimension_numbers = #tpu.dot_dimension_numbers<[1], [0], [0], [1], [0, 0, 1, 1], [], []>} : vector<64x128xbf16>, vector<128x384xbf16>, vector<64x384xf32> -> vector<64x384xf32>
    %4 = vector.shape_cast %3 : vector<64x384xf32> to vector<4x16x384xf32>
    %5 = vector.extract_strided_slice %4 {offsets = [0, 0, 0], sizes = [4, 16, 128], strides = [1, 1, 1]} : vector<4x16x384xf32> to vector<4x16x128xf32>
    %6 = vector.extract_strided_slice %4 {offsets = [0, 0, 128], sizes = [4, 16, 128], strides = [1, 1, 1]} : vector<4x16x384xf32> to vector<4x16x128xf32>
    %7 = vector.extract_strided_slice %4 {offsets = [0, 0, 256], sizes = [4, 16, 128], strides = [1, 1, 1]} : vector<4x16x384xf32> to vector<4x16x128xf32>
    %8 = vector.extract_strided_slice %5 {offsets = [0, 0, 0], sizes = [4, 16, 32], strides = [1, 1, 1]} : vector<4x16x128xf32> to vector<4x16x32xf32>
    %9 = arith.truncf %8 : vector<4x16x32xf32> to vector<4x16x32xbf16>
    %10 = vector.extract_strided_slice %6 {offsets = [0, 0, 0], sizes = [4, 16, 32], strides = [1, 1, 1]} : vector<4x16x128xf32> to vector<4x16x32xf32>
    %11 = arith.truncf %10 : vector<4x16x32xf32> to vector<4x16x32xbf16>
    %12 = vector.extract_strided_slice %7 {offsets = [0, 0, 0], sizes = [4, 16, 32], strides = [1, 1, 1]} : vector<4x16x128xf32> to vector<4x16x32xf32>
    %13 = arith.truncf %12 : vector<4x16x32xf32> to vector<4x16x32xbf16>
    "tpu.trace_start"() <{level = 10 : i32, message = "bnd,bmd->bnm"}> : () -> ()
    %cst_4 = arith.constant dense<0.000000e+00> : vector<4x16x16xf32>
    %14 = tpu.matmul %9, %11, %cst_4 {dimension_numbers = #tpu.dot_dimension_numbers<[2], [2], [1], [1], [0, 0, 0, 1, 1, 1], [0], [0]>} : vector<4x16x32xbf16>, vector<4x16x32xbf16>, vector<4x16x16xf32> -> vector<4x16x16xf32>
    "tpu.trace_stop"() : () -> ()
    %cst_5 = arith.constant 0.176776692 : f32
    %15 = vector.broadcast %cst_5 : f32 to vector<4x16x16xf32>
    %16 = arith.mulf %14, %15 : vector<4x16x16xf32>
    %cst_6 = arith.constant dense<0xFF800000> : vector<4x16xf32>
    %17 = vector.multi_reduction <maximumf>, %16, %cst_6 [2] : vector<4x16x16xf32> to vector<4x16xf32>
    %18 = vector.shape_cast %17 : vector<4x16xf32> to vector<4x16x1xf32>
    %19 = vector.broadcast %18 : vector<4x16x1xf32> to vector<4x16x16xf32>
    %20 = arith.subf %16, %19 : vector<4x16x16xf32>
    %21 = math.exp %20 : vector<4x16x16xf32>
    %cst_7 = arith.constant dense<0.000000e+00> : vector<4x16xf32>
    %22 = vector.multi_reduction <add>, %21, %cst_7 [2] : vector<4x16x16xf32> to vector<4x16xf32>
    %23 = vector.shape_cast %22 : vector<4x16xf32> to vector<4x16x1xf32>
    %24 = tpu.reciprocal %23 {approx = true} : vector<4x16x1xf32> -> vector<4x16x1xf32>
    %25 = vector.broadcast %24 : vector<4x16x1xf32> to vector<4x16x16xf32>
    %26 = arith.mulf %21, %25 : vector<4x16x16xf32>
    %27 = arith.truncf %26 : vector<4x16x16xf32> to vector<4x16x16xbf16>
    "tpu.trace_start"() <{level = 10 : i32, message = "bnm,bmd->bnd"}> : () -> ()
    %cst_8 = arith.constant dense<0.000000e+00> : vector<4x16x32xf32>
    %28 = tpu.matmul %27, %13, %cst_8 {dimension_numbers = #tpu.dot_dimension_numbers<[2], [1], [1], [2], [0, 0, 0, 1, 1, 2], [0], [0]>} : vector<4x16x16xbf16>, vector<4x16x32xbf16>, vector<4x16x32xf32> -> vector<4x16x32xf32>
    "tpu.trace_stop"() : () -> ()
    %29 = vector.extract_strided_slice %5 {offsets = [0, 0, 32], sizes = [4, 16, 32], strides = [1, 1, 1]} : vector<4x16x128xf32> to vector<4x16x32xf32>
    %30 = arith.truncf %29 : vector<4x16x32xf32> to vector<4x16x32xbf16>
    %31 = vector.extract_strided_slice %6 {offsets = [0, 0, 32], sizes = [4, 16, 32], strides = [1, 1, 1]} : vector<4x16x128xf32> to vector<4x16x32xf32>
    %32 = arith.truncf %31 : vector<4x16x32xf32> to vector<4x16x32xbf16>
    %33 = vector.extract_strided_slice %7 {offsets = [0, 0, 32], sizes = [4, 16, 32], strides = [1, 1, 1]} : vector<4x16x128xf32> to vector<4x16x32xf32>
    %34 = arith.truncf %33 : vector<4x16x32xf32> to vector<4x16x32xbf16>
    "tpu.trace_start"() <{level = 10 : i32, message = "bnd,bmd->bnm"}> : () -> ()
    %cst_9 = arith.constant dense<0.000000e+00> : vector<4x16x16xf32>
    %35 = tpu.matmul %30, %32, %cst_9 {dimension_numbers = #tpu.dot_dimension_numbers<[2], [2], [1], [1], [0, 0, 0, 1, 1, 1], [0], [0]>} : vector<4x16x32xbf16>, vector<4x16x32xbf16>, vector<4x16x16xf32> -> vector<4x16x16xf32>
    "tpu.trace_stop"() : () -> ()
    %cst_10 = arith.constant 0.176776692 : f32
    %36 = vector.broadcast %cst_10 : f32 to vector<4x16x16xf32>
    %37 = arith.mulf %35, %36 : vector<4x16x16xf32>
    %cst_11 = arith.constant dense<0xFF800000> : vector<4x16xf32>
    %38 = vector.multi_reduction <maximumf>, %37, %cst_11 [2] : vector<4x16x16xf32> to vector<4x16xf32>
    %39 = vector.shape_cast %38 : vector<4x16xf32> to vector<4x16x1xf32>
    %40 = vector.broadcast %39 : vector<4x16x1xf32> to vector<4x16x16xf32>
    %41 = arith.subf %37, %40 : vector<4x16x16xf32>
    %42 = math.exp %41 : vector<4x16x16xf32>
    %cst_12 = arith.constant dense<0.000000e+00> : vector<4x16xf32>
    %43 = vector.multi_reduction <add>, %42, %cst_12 [2] : vector<4x16x16xf32> to vector<4x16xf32>
    %44 = vector.shape_cast %43 : vector<4x16xf32> to vector<4x16x1xf32>
    %45 = tpu.reciprocal %44 {approx = true} : vector<4x16x1xf32> -> vector<4x16x1xf32>
    %46 = vector.broadcast %45 : vector<4x16x1xf32> to vector<4x16x16xf32>
    %47 = arith.mulf %42, %46 : vector<4x16x16xf32>
    %48 = arith.truncf %47 : vector<4x16x16xf32> to vector<4x16x16xbf16>
    "tpu.trace_start"() <{level = 10 : i32, message = "bnm,bmd->bnd"}> : () -> ()
    %cst_13 = arith.constant dense<0.000000e+00> : vector<4x16x32xf32>
    %49 = tpu.matmul %48, %34, %cst_13 {dimension_numbers = #tpu.dot_dimension_numbers<[2], [1], [1], [2], [0, 0, 0, 1, 1, 2], [0], [0]>} : vector<4x16x16xbf16>, vector<4x16x32xbf16>, vector<4x16x32xf32> -> vector<4x16x32xf32>
    "tpu.trace_stop"() : () -> ()
    %50 = vector.extract_strided_slice %5 {offsets = [0, 0, 64], sizes = [4, 16, 32], strides = [1, 1, 1]} : vector<4x16x128xf32> to vector<4x16x32xf32>
    %51 = arith.truncf %50 : vector<4x16x32xf32> to vector<4x16x32xbf16>
    %52 = vector.extract_strided_slice %6 {offsets = [0, 0, 64], sizes = [4, 16, 32], strides = [1, 1, 1]} : vector<4x16x128xf32> to vector<4x16x32xf32>
    %53 = arith.truncf %52 : vector<4x16x32xf32> to vector<4x16x32xbf16>
    %54 = vector.extract_strided_slice %7 {offsets = [0, 0, 64], sizes = [4, 16, 32], strides = [1, 1, 1]} : vector<4x16x128xf32> to vector<4x16x32xf32>
    %55 = arith.truncf %54 : vector<4x16x32xf32> to vector<4x16x32xbf16>
    "tpu.trace_start"() <{level = 10 : i32, message = "bnd,bmd->bnm"}> : () -> ()
    %cst_14 = arith.constant dense<0.000000e+00> : vector<4x16x16xf32>
    %56 = tpu.matmul %51, %53, %cst_14 {dimension_numbers = #tpu.dot_dimension_numbers<[2], [2], [1], [1], [0, 0, 0, 1, 1, 1], [0], [0]>} : vector<4x16x32xbf16>, vector<4x16x32xbf16>, vector<4x16x16xf32> -> vector<4x16x16xf32>
    "tpu.trace_stop"() : () -> ()
    %cst_15 = arith.constant 0.176776692 : f32
    %57 = vector.broadcast %cst_15 : f32 to vector<4x16x16xf32>
    %58 = arith.mulf %56, %57 : vector<4x16x16xf32>
    %cst_16 = arith.constant dense<0xFF800000> : vector<4x16xf32>
    %59 = vector.multi_reduction <maximumf>, %58, %cst_16 [2] : vector<4x16x16xf32> to vector<4x16xf32>
    %60 = vector.shape_cast %59 : vector<4x16xf32> to vector<4x16x1xf32>
    %61 = vector.broadcast %60 : vector<4x16x1xf32> to vector<4x16x16xf32>
    %62 = arith.subf %58, %61 : vector<4x16x16xf32>
    %63 = math.exp %62 : vector<4x16x16xf32>
    %cst_17 = arith.constant dense<0.000000e+00> : vector<4x16xf32>
    %64 = vector.multi_reduction <add>, %63, %cst_17 [2] : vector<4x16x16xf32> to vector<4x16xf32>
    %65 = vector.shape_cast %64 : vector<4x16xf32> to vector<4x16x1xf32>
    %66 = tpu.reciprocal %65 {approx = true} : vector<4x16x1xf32> -> vector<4x16x1xf32>
    %67 = vector.broadcast %66 : vector<4x16x1xf32> to vector<4x16x16xf32>
    %68 = arith.mulf %63, %67 : vector<4x16x16xf32>
    %69 = arith.truncf %68 : vector<4x16x16xf32> to vector<4x16x16xbf16>
    "tpu.trace_start"() <{level = 10 : i32, message = "bnm,bmd->bnd"}> : () -> ()
    %cst_18 = arith.constant dense<0.000000e+00> : vector<4x16x32xf32>
    %70 = tpu.matmul %69, %55, %cst_18 {dimension_numbers = #tpu.dot_dimension_numbers<[2], [1], [1], [2], [0, 0, 0, 1, 1, 2], [0], [0]>} : vector<4x16x16xbf16>, vector<4x16x32xbf16>, vector<4x16x32xf32> -> vector<4x16x32xf32>
    "tpu.trace_stop"() : () -> ()
    %71 = vector.extract_strided_slice %5 {offsets = [0, 0, 96], sizes = [4, 16, 32], strides = [1, 1, 1]} : vector<4x16x128xf32> to vector<4x16x32xf32>
    %72 = arith.truncf %71 : vector<4x16x32xf32> to vector<4x16x32xbf16>
    %73 = vector.extract_strided_slice %6 {offsets = [0, 0, 96], sizes = [4, 16, 32], strides = [1, 1, 1]} : vector<4x16x128xf32> to vector<4x16x32xf32>
    %74 = arith.truncf %73 : vector<4x16x32xf32> to vector<4x16x32xbf16>
    %75 = vector.extract_strided_slice %7 {offsets = [0, 0, 96], sizes = [4, 16, 32], strides = [1, 1, 1]} : vector<4x16x128xf32> to vector<4x16x32xf32>
    %76 = arith.truncf %75 : vector<4x16x32xf32> to vector<4x16x32xbf16>
    "tpu.trace_start"() <{level = 10 : i32, message = "bnd,bmd->bnm"}> : () -> ()
    %cst_19 = arith.constant dense<0.000000e+00> : vector<4x16x16xf32>
    %77 = tpu.matmul %72, %74, %cst_19 {dimension_numbers = #tpu.dot_dimension_numbers<[2], [2], [1], [1], [0, 0, 0, 1, 1, 1], [0], [0]>} : vector<4x16x32xbf16>, vector<4x16x32xbf16>, vector<4x16x16xf32> -> vector<4x16x16xf32>
    "tpu.trace_stop"() : () -> ()
    %cst_20 = arith.constant 0.176776692 : f32
    %78 = vector.broadcast %cst_20 : f32 to vector<4x16x16xf32>
    %79 = arith.mulf %77, %78 : vector<4x16x16xf32>
    %cst_21 = arith.constant dense<0xFF800000> : vector<4x16xf32>
    %80 = vector.multi_reduction <maximumf>, %79, %cst_21 [2] : vector<4x16x16xf32> to vector<4x16xf32>
    %81 = vector.shape_cast %80 : vector<4x16xf32> to vector<4x16x1xf32>
    %82 = vector.broadcast %81 : vector<4x16x1xf32> to vector<4x16x16xf32>
    %83 = arith.subf %79, %82 : vector<4x16x16xf32>
    %84 = math.exp %83 : vector<4x16x16xf32>
    %cst_22 = arith.constant dense<0.000000e+00> : vector<4x16xf32>
    %85 = vector.multi_reduction <add>, %84, %cst_22 [2] : vector<4x16x16xf32> to vector<4x16xf32>
    %86 = vector.shape_cast %85 : vector<4x16xf32> to vector<4x16x1xf32>
    %87 = tpu.reciprocal %86 {approx = true} : vector<4x16x1xf32> -> vector<4x16x1xf32>
    %88 = vector.broadcast %87 : vector<4x16x1xf32> to vector<4x16x16xf32>
    %89 = arith.mulf %84, %88 : vector<4x16x16xf32>
    %90 = arith.truncf %89 : vector<4x16x16xf32> to vector<4x16x16xbf16>
    "tpu.trace_start"() <{level = 10 : i32, message = "bnm,bmd->bnd"}> : () -> ()
    %cst_23 = arith.constant dense<0.000000e+00> : vector<4x16x32xf32>
    %91 = tpu.matmul %90, %76, %cst_23 {dimension_numbers = #tpu.dot_dimension_numbers<[2], [1], [1], [2], [0, 0, 0, 1, 1, 2], [0], [0]>} : vector<4x16x16xbf16>, vector<4x16x32xbf16>, vector<4x16x32xf32> -> vector<4x16x32xf32>
    "tpu.trace_stop"() : () -> ()
    %92 = tpu.concatenate %28, %49, %70, %91 in 2 : vector<4x16x32xf32>, vector<4x16x32xf32>, vector<4x16x32xf32>, vector<4x16x32xf32> -> vector<4x16x128xf32>
    %93 = vector.shape_cast %92 : vector<4x16x128xf32> to vector<64x128xf32>
    %94 = arith.truncf %93 : vector<64x128xf32> to vector<64x128xbf16>
    %c0_24 = arith.constant 0 : index
    %c0_25 = arith.constant 0 : index
    %95 = vector.load %arg3[%c0_24, %c0_25] : memref<128x128xbf16, #tpu.memory_space<vmem>>, vector<128x128xbf16>
    %cst_26 = arith.constant dense<0.000000e+00> : vector<64x128xf32>
    %96 = tpu.matmul %94, %95, %cst_26 {dimension_numbers = #tpu.dot_dimension_numbers<[1], [0], [0], [1], [0, 0, 1, 1], [], []>} : vector<64x128xbf16>, vector<128x128xbf16>, vector<64x128xf32> -> vector<64x128xf32>
    %c0_27 = arith.constant 0 : index
    %c0_28 = arith.constant 0 : index
    %97 = vector.load %arg4[%c0_27, %c0_28] : memref<1x128xf32, #tpu.memory_space<vmem>>, vector<1x128xf32>
    %98 = vector.broadcast %97 : vector<1x128xf32> to vector<64x128xf32>
    %99 = arith.addf %96, %98 : vector<64x128xf32>
    %100 = vector.shape_cast %99 : vector<64x128xf32> to vector<4x16x128xf32>
    %c0_29 = arith.constant 0 : index
    %c0_30 = arith.constant 0 : index
    %c0_31 = arith.constant 0 : index
    %101 = vector.load %arg5[%c0_29, %c0_30, %c0_31] : memref<4x16x128xf32, #tpu.memory_space<vmem>>, vector<4x16x128xf32>
    tpu.vector_store %arg5[%c0_29, %c0_30, %c0_31], %100 {strides = array<i32>} : memref<4x16x128xf32, #tpu.memory_space<vmem>>, vector<4x16x128xf32>,
    return
  }
  func.func @transform_0(%arg0: i32) -> (i32, i32, i32) {
    %c0_i32 = arith.constant 0 : i32
    %c0_i32_0 = arith.constant 0 : i32
    %c0_i32_1 = arith.constant 0 : i32
    return %arg0, %c0_i32, %c0_i32_0 : i32, i32, i32
  }
  func.func @transform_1(%arg0: i32) -> (i32, i32) {
    %c0_i32 = arith.constant 0 : i32
    %c0_i32_0 = arith.constant 0 : i32
    %c0_i32_1 = arith.constant 0 : i32
    return %c0_i32, %c0_i32_0 : i32, i32
  }
  func.func @transform_2(%arg0: i32) -> (i32, i32) {
    %c0_i32 = arith.constant 0 : i32
    %c0_i32_0 = arith.constant 0 : i32
    %c0_i32_1 = arith.constant 0 : i32
    return %c0_i32, %c0_i32_0 : i32, i32
  }
  func.func @transform_3(%arg0: i32) -> (i32, i32) {
    %c0_i32 = arith.constant 0 : i32
    %c0_i32_0 = arith.constant 0 : i32
    %c0_i32_1 = arith.constant 0 : i32
    return %c0_i32, %c0_i32_0 : i32, i32
  }
  func.func @transform_4(%arg0: i32) -> (i32, i32, i32) {
    %c0_i32 = arith.constant 0 : i32
    %c0_i32_0 = arith.constant 0 : i32
    %c0_i32_1 = arith.constant 0 : i32
    return %arg0, %c0_i32, %c0_i32_0 : i32, i32, i32
  }
}

</mosaic_0001>

<llo_original>
// kernel: attention_forward.1
$region0: #{attention_forward.1}
  #allocation0 [shape = 'u32[]', space=smem, size = 0x4, offset = 0x4, fixed_abs, tag = 'smem constant byte address 0x4 - core index']
  #allocation1 [shape = 'u32[72,128]{1,0:T(1,128)}', space=vmem, size = 0x9000, scoped, tag = 'internal scratch']
  %s0 = inlined_call_operand.vmem [shape: bf16[8,16,128], index: 0, kind: input, shape index: {}]
  %s1 = inlined_call_operand.vmem [shape: bf16[128,384], index: 1, kind: input, shape index: {}]
  %s2 = inlined_call_operand.hbm [shape: bf16[128,128], index: 2, kind: input, shape index: {}]
  %s3 = inlined_call_operand.vmem [shape: f32[1,128], index: 3, kind: input, shape index: {}]
  %s4 = inlined_call_operand.hbm [shape: f32[8,16,128], index: 4, kind: output, shape index: {}]
  %s5 = sld [smem:[#allocation0]]
  $region53: #{attention_forward.1} parent=0
    _
  %s7 = ssub.s32 1, %s5
  %s8 = scalar_select 0, %s7, %s5
  $region1: #{attention_forward.1} parent=0
    #allocation2 [shape = 'u8[32768]{0}', space=vmem, size = 0x8000, scoped, tag = 'input window, operand 2, single buffered']
    #allocation3 [shape = 's32[2]{0}', space=sflag, size = 0x8, scoped, tag = 'scoped memory for attention_forward.1']
    #allocation4 [shape = 's32[2]{0}', space=sflag, size = 0x8, scoped, tag = 'scoped memory for attention_forward.1']
    #allocation5 [shape = 'u8[65536]{0}', space=vmem, size = 0x10000, scoped, tag = 'output window, operand 0']
    %9 = vsyncpa [#allocation3], 0
    %10 = vsyncpa [#allocation4], 0
    %s11 = scalar_lea.sflag [#allocation4], 1
    %12 = vsyncpa %s11, 0
    loop: start=0, step=1, limit=4
    $region2: #{attention_forward.1} parent=1 // loop_pre_header
      _
    $region3: #{attention_forward.1} parent=1 // loop_header
      %s14 = sphi 0, %s18
      %p15 = scmp.ge.s32.totalorder %s14, 4
      %s24 = sphi 0, %s26
      %s27 = sphi 0, %s24
      %s28 = sphi 0, %s27
      %s44 = sphi 0, %s28
      %s48 = sphi 0, %s48
      %s50 = sphi 0, %s48
      %s51 = sphi 0, %s50
      %s65 = sphi 0, %s51
      %s69 = sphi 0, %s69
      %s71 = sphi 0, %s69
      %s72 = sphi 0, %s71
      %s86 = sphi 0, %s72
      %s90 = sphi 0, %s90
      %s92 = sphi 0, %s90
      %s93 = sphi 0, %s92
      %s107 = sphi 0, %s93
      %s113 = sphi 0, %s115
      %s116 = sphi 0, %s113
      %s117 = sphi 0, %s116
      %s133 = sphi 0, %s117
    $region4: #{attention_forward.1} parent=1 // loop_header_branch
      %17 = sbr.rel (%p15) target = $region8
    $region5: #{attention_forward.1} parent=1 // loop_body
      %s19 = ssub.s32 %s14, 1
      %s20 = ssub.s32 %s14, 2
      %s21 = sadd.s32 %s14, 1
      %s22 = ssub.s32 %s14, %s21
      %p23 = scmp.eq.s32.totalorder %s22, 0
      %s25 = sadd.s32 %s24, 1
      %s26 = scalar_select %p23, %s24, %s25
      %p29 = pneg %p23
      %p30 = scmp.eq.s32.totalorder %s14, 1
      %p31 = por %p29, %p30
      %p32 = scmp.ne.s32.totalorder %s24, %s27
      %p33 = scmp.eq.s32.totalorder %s14, 0
      %p34 = por %p32, %p33
      %p35 = scmp.ne.s32.totalorder %s24, %s27
      %p36 = scmp.eq.s32.totalorder %s19, 1
      %p37 = por %p35, %p36
      %p38 = scmp.ne.s32.totalorder %s27, %s28
      %p39 = scmp.eq.s32.totalorder %s19, 0
      %p40 = por %p38, %p39
      %p41 = scmp.ne.s32.totalorder %s27, %s28
      %p42 = scmp.eq.s32.totalorder %s20, 1
      %p43 = por %p41, %p42
      %p45 = scmp.ne.s32.totalorder %s28, %s44
      %p46 = scmp.eq.s32.totalorder %s20, 0
      %p47 = por %p45, %p46
      %s49 = sadd.s32 %s48, 1
      %p52 = scmp.eq.s32.totalorder %s14, 1
      %p53 = scmp.ne.s32.totalorder %s48, %s50
      %p54 = scmp.eq.s32.totalorder %s14, 0
      %p55 = por %p53, %p54
      %p56 = scmp.ne.s32.totalorder %s48, %s50
      %p57 = scmp.eq.s32.totalorder %s19, 1
      %p58 = por %p56, %p57
      %p59 = scmp.ne.s32.totalorder %s50, %s51
      %p60 = scmp.eq.s32.totalorder %s19, 0
      %p61 = por %p59, %p60
      %p62 = scmp.ne.s32.totalorder %s50, %s51
      %p63 = scmp.eq.s32.totalorder %s20, 1
      %p64 = por %p62, %p63
      %p66 = scmp.ne.s32.totalorder %s51, %s65
      %p67 = scmp.eq.s32.totalorder %s20, 0
      %p68 = por %p66, %p67
      %s70 = sadd.s32 %s69, 1
      %p73 = scmp.eq.s32.totalorder %s14, 1
      %p74 = scmp.ne.s32.totalorder %s69, %s71
      %p75 = scmp.eq.s32.totalorder %s14, 0
      %p76 = por %p74, %p75
      %p77 = scmp.ne.s32.totalorder %s69, %s71
      %p78 = scmp.eq.s32.totalorder %s19, 1
      %p79 = por %p77, %p78
      %p80 = scmp.ne.s32.totalorder %s71, %s72
      %p81 = scmp.eq.s32.totalorder %s19, 0
      %p82 = por %p80, %p81
      %p83 = scmp.ne.s32.totalorder %s71, %s72
      %p84 = scmp.eq.s32.totalorder %s20, 1
      %p85 = por %p83, %p84
      %p87 = scmp.ne.s32.totalorder %s72, %s86
      %p88 = scmp.eq.s32.totalorder %s20, 0
      %p89 = por %p87, %p88
      %s91 = sadd.s32 %s90, 1
      %p94 = scmp.eq.s32.totalorder %s14, 1
      %p95 = scmp.ne.s32.totalorder %s90, %s92
      %p96 = scmp.eq.s32.totalorder %s14, 0
      %p97 = por %p95, %p96
      %p98 = scmp.ne.s32.totalorder %s90, %s92
      %p99 = scmp.eq.s32.totalorder %s19, 1
      %p100 = por %p98, %p99
      %p101 = scmp.ne.s32.totalorder %s92, %s93
      %p102 = scmp.eq.s32.totalorder %s19, 0
      %p103 = por %p101, %p102
      %p104 = scmp.ne.s32.totalorder %s92, %s93
      %p105 = scmp.eq.s32.totalorder %s20, 1
      %p106 = por %p104, %p105
      %p108 = scmp.ne.s32.totalorder %s93, %s107
      %p109 = scmp.eq.s32.totalorder %s20, 0
      %p110 = por %p108, %p109
      %s111 = ssub.s32 %s14, %s21
      %p112 = scmp.eq.s32.totalorder %s111, 0
      %s114 = sadd.s32 %s113, 1
      %s115 = scalar_select %p112, %s113, %s114
      %p118 = pneg %p112
      %p119 = scmp.eq.s32.totalorder %s14, 1
      %p120 = por %p118, %p119
      %p121 = scmp.ne.s32.totalorder %s113, %s116
      %p122 = scmp.eq.s32.totalorder %s14, 0
      %p123 = por %p121, %p122
      %p124 = scmp.ne.s32.totalorder %s113, %s116
      %p125 = scmp.eq.s32.totalorder %s19, 1
      %p126 = por %p124, %p125
      %p127 = scmp.ne.s32.totalorder %s116, %s117
      %p128 = scmp.eq.s32.totalorder %s19, 0
      %p129 = por %p127, %p128
      %p130 = scmp.ne.s32.totalorder %s116, %s117
      %p131 = scmp.eq.s32.totalorder %s20, 1
      %p132 = por %p130, %p131
      %p134 = scmp.ne.s32.totalorder %s117, %s133
      %p135 = scmp.eq.s32.totalorder %s20, 0
      %p136 = por %p134, %p135
      %p137 = scmp.le.s32.totalorder 1, %s14
      %p138 = scmp.lt.s32.totalorder %s14, 3
      %p139 = pnand %p137, %p138
      %p140 = pneg %p139
      // Predicated region
      $region9: #{attention_forward.1} parent=5 // pred_check
        _
      $region10: #{attention_forward.1} parent=5 // pred_check_branch
        %142 = sbr.rel (%p139) target = $region12
      $region11: #{attention_forward.1} parent=5 // pred_region
        %s143 = ssub.s32 %s14, 1
        // Predicated region
        $region13: #{attention_forward.1} parent=11 // pred_check
          %p144 = pneg %p61
        $region14: #{attention_forward.1} parent=11 // pred_check_branch
          %146 = sbr.rel (%p144) target = $region16
        $region15: #{attention_forward.1} parent=11 // pred_region
          _
        $region16: #{attention_forward.1} parent=11 // pred_fallthru
          _
        // Predicated region
        $region17: #{attention_forward.1} parent=11 // pred_check
          %p147 = pneg %p82
        $region18: #{attention_forward.1} parent=11 // pred_check_branch
          %149 = sbr.rel (%p147) target = $region20
        $region19: #{attention_forward.1} parent=11 // pred_region
          %151 = vsyncadd [#allocation3], 0
          %s152 = sshll.u32 %s2, 4
          %s153 = int_to_ptr.hbm [resolvable:$true] %s152
          %s154 = sshll.u32 [#allocation2], 4
          %s155 = int_to_ptr.vmem [resolvable:$true] %s154
          %160 = dma.hbm_to_vmem [thread:$0]  %s153, 1024, %s155, [#allocation3], 64, 64, 4
        $region20: #{attention_forward.1} parent=11 // pred_fallthru
          _
        // Predicated region
        $region21: #{attention_forward.1} parent=11 // pred_check
          %p161 = pneg %p103
        $region22: #{attention_forward.1} parent=11 // pred_check_branch
          %163 = sbr.rel (%p161) target = $region24
        $region23: #{attention_forward.1} parent=11 // pred_region
          _
        $region24: #{attention_forward.1} parent=11 // pred_fallthru
          _
      $region12: #{attention_forward.1} parent=5 // pred_fallthru
        _
      %p164 = scmp.lt.s32.totalorder %s14, 2
      // Predicated region
      $region25: #{attention_forward.1} parent=5 // pred_check
        %p165 = pneg %p164
      $region26: #{attention_forward.1} parent=5 // pred_check_branch
        %167 = sbr.rel (%p165) target = $region28
      $region27: #{attention_forward.1} parent=5 // pred_region
        // Predicated region
        $region29: #{attention_forward.1} parent=27 // pred_check
          %p168 = pneg %p34
        $region30: #{attention_forward.1} parent=27 // pred_check_branch
          %170 = sbr.rel (%p168) target = $region32
        $region31: #{attention_forward.1} parent=27 // pred_region
          %s171 = smul.u32 4, %s14
          %p172 = scmp.lt.s32.totalorder %s171, 7
          %s173 = scalar_select %p172, %s171, 7
          %s174 = smul.addr %s173, 2
          %s175 = smul.addr %s174, 4
          %s176 = scalar_lea.vmem %s0, %s175
          %s177 = smul.u32 4, %s14
        $region32: #{attention_forward.1} parent=27 // pred_fallthru
          _
      $region28: #{attention_forward.1} parent=5 // pred_fallthru
        _
      %p178 = scmp.le.s32.totalorder 1, %s14
      %p179 = scmp.lt.s32.totalorder %s14, 3
      %p180 = pnand %p178, %p179
      %p181 = pneg %p180
      // Predicated region
      $region33: #{attention_forward.1} parent=5 // pred_check
        _
      $region34: #{attention_forward.1} parent=5 // pred_check_branch
        %183 = sbr.rel (%p180) target = $region36
      $region35: #{attention_forward.1} parent=5 // pred_region
        %s184 = ssub.s32 %s14, 1
        // Predicated region
        $region37: #{attention_forward.1} parent=35 // pred_check
          %p185 = pneg %p82
        $region38: #{attention_forward.1} parent=35 // pred_check_branch
          %187 = sbr.rel (%p185) target = $region40
        $region39: #{attention_forward.1} parent=35 // pred_region
          %189 = dma.done [#allocation3], 1024
        $region40: #{attention_forward.1} parent=35 // pred_fallthru
          _
        %s190 = smul.u32 4, %s19
        %p191 = scmp.lt.s32.totalorder %s190, 7
        %s192 = scalar_select %p191, %s190, 7
        %s193 = smul.addr %s192, 2
        %s194 = smul.addr %s193, 4
        %s195 = scalar_lea.vmem %s0, %s194
        %p196 = pneg %p40
        %p197 = pneg %p37
        %p198 = pneg %p61
        %p199 = pneg %p58
        %p200 = pneg %p82
        %p201 = pneg %p79
        %p202 = pneg %p103
        %p203 = pneg %p100
        %p204 = pneg %p129
        %p205 = pneg %p126
        %s206 = sand.u32 %s116, 1
        %s207 = scalar_lea.sflag [#allocation4], %s206
        %s208 = sand.u32 %s116, 1
        %s209 = smul.addr %s208, 64
        %s210 = scalar_lea.vmem [#allocation5], %s209
        %s211 = smul.u32 4, %s19
        %p212 = scmp.lt.s32.totalorder %s211, 7
        %s213 = scalar_select %p212, %s211, 7
        %s214 = smul.addr %s213, 2
        %s215 = smul.addr %s214, 4
        %s216 = scalar_lea.vmem %s0, %s215
        %s217 = smul.u32 4, %s19
        %s218 = smul.u32 4, %s19
        %v220 = vld [vmem:[%s216] sm:$0xf]
        %v221 = vld [vmem:[%s216 + $0x4] sm:$0xf]
        %v222 = vld [vmem:[%s216 + $0x8] sm:$0xf]
        %v223 = vld [vmem:[%s216 + $0xc] sm:$0xf]
        %v224 = vld [vmem:[%s216 + $0x10] sm:$0xf]
        %v225 = vld [vmem:[%s216 + $0x14] sm:$0xf]
        %v226 = vld [vmem:[%s216 + $0x18] sm:$0xf]
        %v227 = vld [vmem:[%s216 + $0x1c] sm:$0xf]
        %v228 = vld [vmem:[%s1] sm:$0xff]
        %v229 = vld [vmem:[%s1 + $0x8] sm:$0xf]
        %v230 = vld [vmem:[%s1 + $0xc] sm:$0xff]
        %v231 = vld [vmem:[%s1 + $0x14] sm:$0xf]
        %v232 = vld [vmem:[%s1 + $0x18] sm:$0xff]
        %v233 = vld [vmem:[%s1 + $0x20] sm:$0xf]
        %v234 = vld [vmem:[%s1 + $0x24] sm:$0xff]
        %v235 = vld [vmem:[%s1 + $0x2c] sm:$0xf]
        %v236 = vld [vmem:[%s1 + $0x30] sm:$0xff]
        %v237 = vld [vmem:[%s1 + $0x38] sm:$0xf]
        %v238 = vld [vmem:[%s1 + $0x3c] sm:$0xff]
        %v239 = vld [vmem:[%s1 + $0x44] sm:$0xf]
        %v240 = vld [vmem:[%s1 + $0x48] sm:$0xff]
        %v241 = vld [vmem:[%s1 + $0x50] sm:$0xf]
        %v242 = vld [vmem:[%s1 + $0x54] sm:$0xff]
        %v243 = vld [vmem:[%s1 + $0x5c] sm:$0xf]
        %v244 = vld [vmem:[%s1 + $0x60] sm:$0xff]
        %v245 = vld [vmem:[%s1 + $0x68] sm:$0xf]
        %v246 = vld [vmem:[%s1 + $0x6c] sm:$0xff]
        %v247 = vld [vmem:[%s1 + $0x74] sm:$0xf]
        %v248 = vld [vmem:[%s1 + $0x78] sm:$0xff]
        %v249 = vld [vmem:[%s1 + $0x80] sm:$0xf]
        %v250 = vld [vmem:[%s1 + $0x84] sm:$0xff]
        %v251 = vld [vmem:[%s1 + $0x8c] sm:$0xf]
        %v252 = vld [vmem:[%s1 + $0x90] sm:$0xff]
        %v253 = vld [vmem:[%s1 + $0x98] sm:$0xf]
        %v254 = vld [vmem:[%s1 + $0x9c] sm:$0xff]
        %v255 = vld [vmem:[%s1 + $0xa4] sm:$0xf]
        %v256 = vld [vmem:[%s1 + $0xa8] sm:$0xff]
        %v257 = vld [vmem:[%s1 + $0xb0] sm:$0xf]
        %v258 = vld [vmem:[%s1 + $0xb4] sm:$0xff]
        %v259 = vld [vmem:[%s1 + $0xbc] sm:$0xf]
        %v268 = vunpack.c.l.b16 %v220
        %v269 = vunpack.c.l.b16 %v221
        %v270 = vunpack.c.l.b16 %v222
        %v271 = vunpack.c.l.b16 %v223
        %v272 = vunpack.c.l.b16 %v224
        %v273 = vunpack.c.l.b16 %v225
        %v274 = vunpack.c.l.b16 %v226
        %v275 = vunpack.c.l.b16 %v227
        %v276 = vpack.c.b16 %v269, %v268
        %v277 = vpack.c.b16 %v271, %v270
        %v278 = vpack.c.b16 %v273, %v272
        %v279 = vpack.c.b16 %v275, %v274
        %v316 = vunpack.c.l.b16 %v228
        %v317 = vunpack.c.h.b16 %v228
        %v318 = vunpack.c.l.b16 %v229
        %v319 = vunpack.c.l.b16 %v230
        %v320 = vunpack.c.h.b16 %v230
        %v321 = vunpack.c.l.b16 %v231
        %v322 = vunpack.c.l.b16 %v232
        %v323 = vunpack.c.h.b16 %v232
        %v324 = vunpack.c.l.b16 %v233
        %v325 = vunpack.c.l.b16 %v234
        %v326 = vunpack.c.h.b16 %v234
        %v327 = vunpack.c.l.b16 %v235
        %v328 = vunpack.c.l.b16 %v236
        %v329 = vunpack.c.h.b16 %v236
        %v330 = vunpack.c.l.b16 %v237
        %v331 = vunpack.c.l.b16 %v238
        %v332 = vunpack.c.h.b16 %v238
        %v333 = vunpack.c.l.b16 %v239
        %v334 = vunpack.c.l.b16 %v240
        %v335 = vunpack.c.h.b16 %v240
        %v336 = vunpack.c.l.b16 %v241
        %v337 = vunpack.c.l.b16 %v242
        %v338 = vunpack.c.h.b16 %v242
        %v339 = vunpack.c.l.b16 %v243
        %v340 = vunpack.c.l.b16 %v244
        %v341 = vunpack.c.h.b16 %v244
        %v342 = vunpack.c.l.b16 %v245
        %v343 = vunpack.c.l.b16 %v246
        %v344 = vunpack.c.h.b16 %v246
        %v345 = vunpack.c.l.b16 %v247
        %v346 = vunpack.c.l.b16 %v248
        %v347 = vunpack.c.h.b16 %v248
        %v348 = vunpack.c.l.b16 %v249
        %v349 = vunpack.c.l.b16 %v250
        %v350 = vunpack.c.h.b16 %v250
        %v351 = vunpack.c.l.b16 %v251
        %v352 = vunpack.c.l.b16 %v252
        %v353 = vunpack.c.h.b16 %v252
        %v354 = vunpack.c.l.b16 %v253
        %v355 = vunpack.c.l.b16 %v254
        %v356 = vunpack.c.h.b16 %v254
        %v357 = vunpack.c.l.b16 %v255
        %v358 = vunpack.c.l.b16 %v256
        %v359 = vunpack.c.h.b16 %v256
        %v360 = vunpack.c.l.b16 %v257
        %v361 = vunpack.c.l.b16 %v258
        %v362 = vunpack.c.h.b16 %v258
        %v363 = vunpack.c.l.b16 %v259
        %v364 = vpack.c.b16 %v319, %v316
        %v365 = vpack.c.b16 %v320, %v317
        %v366 = vpack.c.b16 %v321, %v318
        %v367 = vpack.c.b16 %v325, %v322
        %v368 = vpack.c.b16 %v326, %v323
        %v369 = vpack.c.b16 %v327, %v324
        %v370 = vpack.c.b16 %v331, %v328
        %v371 = vpack.c.b16 %v332, %v329
        %v372 = vpack.c.b16 %v333, %v330
        %v373 = vpack.c.b16 %v337, %v334
        %v374 = vpack.c.b16 %v338, %v335
        %v375 = vpack.c.b16 %v339, %v336
        %v376 = vpack.c.b16 %v343, %v340
        %v377 = vpack.c.b16 %v344, %v341
        %v378 = vpack.c.b16 %v345, %v342
        %v379 = vpack.c.b16 %v349, %v346
        %v380 = vpack.c.b16 %v350, %v347
        %v381 = vpack.c.b16 %v351, %v348
        %v382 = vpack.c.b16 %v355, %v352
        %v383 = vpack.c.b16 %v356, %v353
        %v384 = vpack.c.b16 %v357, %v354
        %v385 = vpack.c.b16 %v361, %v358
        %v386 = vpack.c.b16 %v362, %v359
        %v387 = vpack.c.b16 %v363, %v360
        %412 = vmatpush.bf16.msra.mxu0 %v385
        %413 = vmatpush.bf16.msra.mxu0 %v382
        %414 = vmatpush.bf16.msra.mxu0 %v379
        %415 = vmatpush.bf16.msra.mxu0 %v376
        %416 = vmatpush.bf16.msra.mxu0 %v373
        %417 = vmatpush.bf16.msra.mxu0 %v370
        %418 = vmatpush.bf16.msra.mxu0 %v367
        %419 = vmatpush.bf16.msra.mxu0 %v364
        %420 = vmatmul.bf16.gmra.mxu0 %v276
        %v421 = vpop.f32.mrf.mxu0
        %v422 = vadd.f32 0.0, %v421
        %v423 = vpop.f32.mrf.mxu0
        %v424 = vadd.f32 0.0, %v423
        %425 = vmatmul.bf16.gmra.mxu0 %v277
        %v426 = vpop.f32.mrf.mxu0
        %v427 = vadd.f32 0.0, %v426
        %v428 = vpop.f32.mrf.mxu0
        %v429 = vadd.f32 0.0, %v428
        %430 = vmatmul.bf16.gmra.mxu0 %v278
        %v431 = vpop.f32.mrf.mxu0
        %v432 = vadd.f32 0.0, %v431
        %v433 = vpop.f32.mrf.mxu0
        %v434 = vadd.f32 0.0, %v433
        %435 = vmatmul.bf16.gmra.mxu0 %v279
        %v436 = vpop.f32.mrf.mxu0
        %v437 = vadd.f32 0.0, %v436
        %v438 = vpop.f32.mrf.mxu0
        %v439 = vadd.f32 0.0, %v438
        %440 = vdwg.mxu0
        %441 = vmatpush.bf16.msra.mxu0 %v386
        %442 = vmatpush.bf16.msra.mxu0 %v383
        %443 = vmatpush.bf16.msra.mxu0 %v380
        %444 = vmatpush.bf16.msra.mxu0 %v377
        %445 = vmatpush.bf16.msra.mxu0 %v374
        %446 = vmatpush.bf16.msra.mxu0 %v371
        %447 = vmatpush.bf16.msra.mxu0 %v368
        %448 = vmatpush.bf16.msra.mxu0 %v365
        %449 = vmatmul.bf16.gmra.mxu0 %v276
        %v450 = vpop.f32.mrf.mxu0
        %v451 = vadd.f32 0.0, %v450
        %v452 = vpop.f32.mrf.mxu0
        %v453 = vadd.f32 0.0, %v452
        %454 = vmatmul.bf16.gmra.mxu0 %v277
        %v455 = vpop.f32.mrf.mxu0
        %v456 = vadd.f32 0.0, %v455
        %v457 = vpop.f32.mrf.mxu0
        %v458 = vadd.f32 0.0, %v457
        %459 = vmatmul.bf16.gmra.mxu0 %v278
        %v460 = vpop.f32.mrf.mxu0
        %v461 = vadd.f32 0.0, %v460
        %v462 = vpop.f32.mrf.mxu0
        %v463 = vadd.f32 0.0, %v462
        %464 = vmatmul.bf16.gmra.mxu0 %v279
        %v465 = vpop.f32.mrf.mxu0
        %v466 = vadd.f32 0.0, %v465
        %v467 = vpop.f32.mrf.mxu0
        %v468 = vadd.f32 0.0, %v467
        %469 = vdwg.mxu0
        %470 = vmatpush.bf16.msra.mxu0 %v387
        %471 = vmatpush.bf16.msra.mxu0 %v384
        %472 = vmatpush.bf16.msra.mxu0 %v381
        %473 = vmatpush.bf16.msra.mxu0 %v378
        %474 = vmatpush.bf16.msra.mxu0 %v375
        %475 = vmatpush.bf16.msra.mxu0 %v372
        %476 = vmatpush.bf16.msra.mxu0 %v369
        %477 = vmatpush.bf16.msra.mxu0 %v366
        %478 = vmatmul.bf16.gmra.mxu0 %v276
        %v479 = vpop.f32.mrf.mxu0
        %v480 = vadd.f32 0.0, %v479
        %v481 = vpop.f32.mrf.mxu0
        %v482 = vadd.f32 0.0, %v481
        %483 = vmatmul.bf16.gmra.mxu0 %v277
        %v484 = vpop.f32.mrf.mxu0
        %v485 = vadd.f32 0.0, %v484
        %v486 = vpop.f32.mrf.mxu0
        %v487 = vadd.f32 0.0, %v486
        %488 = vmatmul.bf16.gmra.mxu0 %v278
        %v489 = vpop.f32.mrf.mxu0
        %v490 = vadd.f32 0.0, %v489
        %v491 = vpop.f32.mrf.mxu0
        %v492 = vadd.f32 0.0, %v491
        %493 = vmatmul.bf16.gmra.mxu0 %v279
        %v494 = vpop.f32.mrf.mxu0
        %v495 = vadd.f32 0.0, %v494
        %v496 = vpop.f32.mrf.mxu0
        %v497 = vadd.f32 0.0, %v496
        %498 = vdwg.mxu0
        %v499 = vpack.c.bf16 %v422, %v422
        %v500 = vpack.c.bf16 %v424, %v424
        %v501 = vpack.c.bf16 %v427, %v427
        %v502 = vpack.c.bf16 %v429, %v429
        %v503 = vpack.c.bf16 %v432, %v432
        %v504 = vpack.c.bf16 %v434, %v434
        %v505 = vpack.c.bf16 %v437, %v437
        %v506 = vpack.c.bf16 %v439, %v439
        %v507 = vpack.c.bf16 %v451, %v451
        %v508 = vpack.c.bf16 %v453, %v453
        %v509 = vpack.c.bf16 %v456, %v456
        %v510 = vpack.c.bf16 %v458, %v458
        %v511 = vpack.c.bf16 %v461, %v461
        %v512 = vpack.c.bf16 %v463, %v463
        %v513 = vpack.c.bf16 %v466, %v466
        %v514 = vpack.c.bf16 %v468, %v468
        %v515 = vpack.c.bf16 %v480, %v480
        %v516 = vpack.c.bf16 %v482, %v482
        %v517 = vpack.c.bf16 %v485, %v485
        %v518 = vpack.c.bf16 %v487, %v487
        %v519 = vpack.c.bf16 %v490, %v490
        %v520 = vpack.c.bf16 %v492, %v492
        %v521 = vpack.c.bf16 %v495, %v495
        %v522 = vpack.c.bf16 %v497, %v497
        %v525 = vunpack.c.l.b16 %v499
        %v526 = vunpack.c.l.b16 %v500
        %v527 = vpack.c.b16 %v526, %v525
        %v530 = vunpack.c.l.b16 %v507
        %v531 = vunpack.c.l.b16 %v508
        %v532 = vpack.c.b16 %v531, %v530
        %vm533 = vcmask 261120
        %v535 = vsel %vm533, %v527, 0
        %v538 = vsel %vm533, %v532, 0
        %540 = vmatpush.bf16.xpose.msra.mxu0 0
        %541 = vmatpush.bf16.xpose.msra.mxu0 0
        %542 = vmatpush.bf16.xpose.msra.mxu0 0
        %543 = vmatpush.bf16.xpose.msra.mxu0 0
        %544 = vmatpush.bf16.xpose.msra.mxu0 0
        %545 = vmatpush.bf16.xpose.msra.mxu0 0
        %546 = vmatpush.bf16.xpose.msra.mxu0 0
        %547 = vmatpush.bf16.xpose.msra.mxu0 %v538
        %548 = vmatmul.bf16.gmra.mxu0 %v535
        %v549 = vpop.f32.mrf.mxu0
        %v550 = vadd.f32 0.0, %v549
        %v551 = vpop.f32.mrf.mxu0
        %v552 = vadd.f32 0.0, %v551
        %553 = vdwg.mxu0
        %v556 = vunpack.c.l.b16 %v501
        %v557 = vunpack.c.l.b16 %v502
        %v558 = vpack.c.b16 %v557, %v556
        %v561 = vunpack.c.l.b16 %v509
        %v562 = vunpack.c.l.b16 %v510
        %v563 = vpack.c.b16 %v562, %v561
        %v565 = vsel %vm533, %v558, 0
        %v568 = vsel %vm533, %v563, 0
        %570 = vmatpush.bf16.xpose.msra.mxu0 0
        %571 = vmatpush.bf16.xpose.msra.mxu0 0
        %572 = vmatpush.bf16.xpose.msra.mxu0 0
        %573 = vmatpush.bf16.xpose.msra.mxu0 0
        %574 = vmatpush.bf16.xpose.msra.mxu0 0
        %575 = vmatpush.bf16.xpose.msra.mxu0 0
        %576 = vmatpush.bf16.xpose.msra.mxu0 0
        %577 = vmatpush.bf16.xpose.msra.mxu0 %v568
        %578 = vmatmul.bf16.gmra.mxu0 %v565
        %v579 = vpop.f32.mrf.mxu0
        %v580 = vadd.f32 0.0, %v579
        %v581 = vpop.f32.mrf.mxu0
        %v582 = vadd.f32 0.0, %v581
        %583 = vdwg.mxu0
        %v586 = vunpack.c.l.b16 %v503
        %v587 = vunpack.c.l.b16 %v504
        %v588 = vpack.c.b16 %v587, %v586
        %v591 = vunpack.c.l.b16 %v511
        %v592 = vunpack.c.l.b16 %v512
        %v593 = vpack.c.b16 %v592, %v591
        %v595 = vsel %vm533, %v588, 0
        %v598 = vsel %vm533, %v593, 0
        %600 = vmatpush.bf16.xpose.msra.mxu0 0
        %601 = vmatpush.bf16.xpose.msra.mxu0 0
        %602 = vmatpush.bf16.xpose.msra.mxu0 0
        %603 = vmatpush.bf16.xpose.msra.mxu0 0
        %604 = vmatpush.bf16.xpose.msra.mxu0 0
        %605 = vmatpush.bf16.xpose.msra.mxu0 0
        %606 = vmatpush.bf16.xpose.msra.mxu0 0
        %607 = vmatpush.bf16.xpose.msra.mxu0 %v598
        %608 = vmatmul.bf16.gmra.mxu0 %v595
        %v609 = vpop.f32.mrf.mxu0
        %v610 = vadd.f32 0.0, %v609
        %v611 = vpop.f32.mrf.mxu0
        %v612 = vadd.f32 0.0, %v611
        %613 = vdwg.mxu0
        %v616 = vunpack.c.l.b16 %v505
        %v617 = vunpack.c.l.b16 %v506
        %v618 = vpack.c.b16 %v617, %v616
        %v621 = vunpack.c.l.b16 %v513
        %v622 = vunpack.c.l.b16 %v514
        %v623 = vpack.c.b16 %v622, %v621
        %v625 = vsel %vm533, %v618, 0
        %v628 = vsel %vm533, %v623, 0
        %630 = vmatpush.bf16.xpose.msra.mxu0 0
        %631 = vmatpush.bf16.xpose.msra.mxu0 0
        %632 = vmatpush.bf16.xpose.msra.mxu0 0
        %633 = vmatpush.bf16.xpose.msra.mxu0 0
        %634 = vmatpush.bf16.xpose.msra.mxu0 0
        %635 = vmatpush.bf16.xpose.msra.mxu0 0
        %636 = vmatpush.bf16.xpose.msra.mxu0 0
        %637 = vmatpush.bf16.xpose.msra.mxu0 %v628
        %638 = vmatmul.bf16.gmra.mxu0 %v625
        %v639 = vpop.f32.mrf.mxu0
        %v640 = vadd.f32 0.0, %v639
        %v641 = vpop.f32.mrf.mxu0
        %v642 = vadd.f32 0.0, %v641
        %643 = vdwg.mxu0
        %v644 = vmul.f32 %v550, 0.17677669
        %v645 = vmul.f32 %v552, 0.17677669
        %v646 = vmul.f32 %v580, 0.17677669
        %v647 = vmul.f32 %v582, 0.17677669
        %v648 = vmul.f32 %v610, 0.17677669
        %v649 = vmul.f32 %v612, 0.17677669
        %v650 = vmul.f32 %v640, 0.17677669
        %v651 = vmul.f32 %v642, 0.17677669
        %vm652 = vcmask 130048
        %v653 = vsel %vm652, %v644, -inf
        %654 = vmax.xlane.f32.xlu0 %v653
        %v655 = vpop.xlane.xlu0 %654
        %v656 = vsel %vm652, %v645, -inf
        %657 = vmax.xlane.f32.xlu0 %v656
        %v658 = vpop.xlane.xlu0 %657
        %v659 = vsel %vm652, %v646, -inf
        %660 = vmax.xlane.f32.xlu0 %v659
        %v661 = vpop.xlane.xlu0 %660
        %v662 = vsel %vm652, %v647, -inf
        %663 = vmax.xlane.f32.xlu0 %v662
        %v664 = vpop.xlane.xlu0 %663
        %v665 = vsel %vm652, %v648, -inf
        %666 = vmax.xlane.f32.xlu0 %v665
        %v667 = vpop.xlane.xlu0 %666
        %v668 = vsel %vm652, %v649, -inf
        %669 = vmax.xlane.f32.xlu0 %v668
        %v670 = vpop.xlane.xlu0 %669
        %v671 = vsel %vm652, %v650, -inf
        %672 = vmax.xlane.f32.xlu0 %v671
        %v673 = vpop.xlane.xlu0 %672
        %v674 = vsel %vm652, %v651, -inf
        %675 = vmax.xlane.f32.xlu0 %v674
        %v676 = vpop.xlane.xlu0 %675
        %v677 = vsub.f32 %v644, %v655
        %v678 = vsub.f32 %v645, %v658
        %v679 = vsub.f32 %v646, %v661
        %v680 = vsub.f32 %v647, %v664
        %v681 = vsub.f32 %v648, %v667
        %v682 = vsub.f32 %v649, %v670
        %v683 = vsub.f32 %v650, %v673
        %v684 = vsub.f32 %v651, %v676
        %v685 = vmul.f32 %v677, 1.442695
        %v686 = vpow.pop %v685
        %v687 = vmul.f32 %v678, 1.442695
        %v688 = vpow.pop %v687
        %v689 = vmul.f32 %v679, 1.442695
        %v690 = vpow.pop %v689
        %v691 = vmul.f32 %v680, 1.442695
        %v692 = vpow.pop %v691
        %v693 = vmul.f32 %v681, 1.442695
        %v694 = vpow.pop %v693
        %v695 = vmul.f32 %v682, 1.442695
        %v696 = vpow.pop %v695
        %v697 = vmul.f32 %v683, 1.442695
        %v698 = vpow.pop %v697
        %v699 = vmul.f32 %v684, 1.442695
        %v700 = vpow.pop %v699
        %v701 = vsel %vm652, %v686, 0.0
        %702 = vadd.xlane.f32.xlu0 %v701
        %v703 = vpop.xlane.xlu0 %702
        %v704 = vsel %vm652, %v688, 0.0
        %705 = vadd.xlane.f32.xlu0 %v704
        %v706 = vpop.xlane.xlu0 %705
        %v707 = vsel %vm652, %v690, 0.0
        %708 = vadd.xlane.f32.xlu0 %v707
        %v709 = vpop.xlane.xlu0 %708
        %v710 = vsel %vm652, %v692, 0.0
        %711 = vadd.xlane.f32.xlu0 %v710
        %v712 = vpop.xlane.xlu0 %711
        %v713 = vsel %vm652, %v694, 0.0
        %714 = vadd.xlane.f32.xlu0 %v713
        %v715 = vpop.xlane.xlu0 %714
        %v716 = vsel %vm652, %v696, 0.0
        %717 = vadd.xlane.f32.xlu0 %v716
        %v718 = vpop.xlane.xlu0 %717
        %v719 = vsel %vm652, %v698, 0.0
        %720 = vadd.xlane.f32.xlu0 %v719
        %v721 = vpop.xlane.xlu0 %720
        %v722 = vsel %vm652, %v700, 0.0
        %723 = vadd.xlane.f32.xlu0 %v722
        %v724 = vpop.xlane.xlu0 %723
        %v725 = vrcp.pop %v703
        %v726 = vrcp.pop %v706
        %v727 = vrcp.pop %v709
        %v728 = vrcp.pop %v712
        %v729 = vrcp.pop %v715
        %v730 = vrcp.pop %v718
        %v731 = vrcp.pop %v721
        %v732 = vrcp.pop %v724
        %v733 = vmul.f32 %v686, %v725
        %v734 = vmul.f32 %v688, %v726
        %v735 = vmul.f32 %v690, %v727
        %v736 = vmul.f32 %v692, %v728
        %v737 = vmul.f32 %v694, %v729
        %v738 = vmul.f32 %v696, %v730
        %v739 = vmul.f32 %v698, %v731
        %v740 = vmul.f32 %v700, %v732
        %v741 = vpack.c.bf16 %v733, %v733
        %v742 = vpack.c.bf16 %v734, %v734
        %v743 = vpack.c.bf16 %v735, %v735
        %v744 = vpack.c.bf16 %v736, %v736
        %v745 = vpack.c.bf16 %v737, %v737
        %v746 = vpack.c.bf16 %v738, %v738
        %v747 = vpack.c.bf16 %v739, %v739
        %v748 = vpack.c.bf16 %v740, %v740
        %v751 = vunpack.c.l.b16 %v741
        %v752 = vunpack.c.l.b16 %v742
        %v753 = vpack.c.b16 %v752, %v751
        %v756 = vunpack.c.l.b16 %v515
        %v757 = vunpack.c.l.b16 %v516
        %v758 = vpack.c.b16 %v757, %v756
        %v761 = vsel %vm652, %v753, 0
        %763 = vmatpush.bf16.msra.mxu0 0
        %764 = vmatpush.bf16.msra.mxu0 0
        %765 = vmatpush.bf16.msra.mxu0 0
        %766 = vmatpush.bf16.msra.mxu0 0
        %767 = vmatpush.bf16.msra.mxu0 0
        %768 = vmatpush.bf16.msra.mxu0 0
        %769 = vmatpush.bf16.msra.mxu0 0
        %770 = vmatpush.bf16.msra.mxu0 %v758
        %771 = vmatmul.bf16.gmra.mxu0 %v761
        %v772 = vpop.f32.mrf.mxu0
        %v773 = vadd.f32 0.0, %v772
        %v774 = vpop.f32.mrf.mxu0
        %v775 = vadd.f32 0.0, %v774
        %776 = vdwg.mxu0
        %v779 = vunpack.c.l.b16 %v743
        %v780 = vunpack.c.l.b16 %v744
        %v781 = vpack.c.b16 %v780, %v779
        %v784 = vunpack.c.l.b16 %v517
        %v785 = vunpack.c.l.b16 %v518
        %v786 = vpack.c.b16 %v785, %v784
        %v789 = vsel %vm652, %v781, 0
        %791 = vmatpush.bf16.msra.mxu0 0
        %792 = vmatpush.bf16.msra.mxu0 0
        %793 = vmatpush.bf16.msra.mxu0 0
        %794 = vmatpush.bf16.msra.mxu0 0
        %795 = vmatpush.bf16.msra.mxu0 0
        %796 = vmatpush.bf16.msra.mxu0 0
        %797 = vmatpush.bf16.msra.mxu0 0
        %798 = vmatpush.bf16.msra.mxu0 %v786
        %799 = vmatmul.bf16.gmra.mxu0 %v789
        %v800 = vpop.f32.mrf.mxu0
        %v801 = vadd.f32 0.0, %v800
        %v802 = vpop.f32.mrf.mxu0
        %v803 = vadd.f32 0.0, %v802
        %804 = vdwg.mxu0
        %v807 = vunpack.c.l.b16 %v745
        %v808 = vunpack.c.l.b16 %v746
        %v809 = vpack.c.b16 %v808, %v807
        %v812 = vunpack.c.l.b16 %v519
        %v813 = vunpack.c.l.b16 %v520
        %v814 = vpack.c.b16 %v813, %v812
        %v817 = vsel %vm652, %v809, 0
        %819 = vmatpush.bf16.msra.mxu0 0
        %820 = vmatpush.bf16.msra.mxu0 0
        %821 = vmatpush.bf16.msra.mxu0 0
        %822 = vmatpush.bf16.msra.mxu0 0
        %823 = vmatpush.bf16.msra.mxu0 0
        %824 = vmatpush.bf16.msra.mxu0 0
        %825 = vmatpush.bf16.msra.mxu0 0
        %826 = vmatpush.bf16.msra.mxu0 %v814
        %827 = vmatmul.bf16.gmra.mxu0 %v817
        %v828 = vpop.f32.mrf.mxu0
        %v829 = vadd.f32 0.0, %v828
        %v830 = vpop.f32.mrf.mxu0
        %v831 = vadd.f32 0.0, %v830
        %832 = vdwg.mxu0
        %v835 = vunpack.c.l.b16 %v747
        %v836 = vunpack.c.l.b16 %v748
        %v837 = vpack.c.b16 %v836, %v835
        %v840 = vunpack.c.l.b16 %v521
        %v841 = vunpack.c.l.b16 %v522
        %v842 = vpack.c.b16 %v841, %v840
        %v845 = vsel %vm652, %v837, 0
        %847 = vmatpush.bf16.msra.mxu0 0
        %848 = vmatpush.bf16.msra.mxu0 0
        %849 = vmatpush.bf16.msra.mxu0 0
        %850 = vmatpush.bf16.msra.mxu0 0
        %851 = vmatpush.bf16.msra.mxu0 0
        %852 = vmatpush.bf16.msra.mxu0 0
        %853 = vmatpush.bf16.msra.mxu0 0
        %854 = vmatpush.bf16.msra.mxu0 %v842
        %855 = vmatmul.bf16.gmra.mxu0 %v845
        %v856 = vpop.f32.mrf.mxu0
        %v857 = vadd.f32 0.0, %v856
        %v858 = vpop.f32.mrf.mxu0
        %v859 = vadd.f32 0.0, %v858
        %860 = vdwg.mxu0
        %861 = vrot.lane.b32.xlu0 %v527, 96
        %v862 = vpop.permute.xlu0 %861
        %863 = vrot.lane.b32.xlu0 %v532, 96
        %v864 = vpop.permute.xlu0 %863
        %v866 = vsel %vm533, %v862, 0
        %v869 = vsel %vm533, %v864, 0
        %871 = vmatpush.bf16.xpose.msra.mxu0 0
        %872 = vmatpush.bf16.xpose.msra.mxu0 0
        %873 = vmatpush.bf16.xpose.msra.mxu0 0
        %874 = vmatpush.bf16.xpose.msra.mxu0 0
        %875 = vmatpush.bf16.xpose.msra.mxu0 0
        %876 = vmatpush.bf16.xpose.msra.mxu0 0
        %877 = vmatpush.bf16.xpose.msra.mxu0 0
        %878 = vmatpush.bf16.xpose.msra.mxu0 %v869
        %879 = vmatmul.bf16.gmra.mxu0 %v866
        %v880 = vpop.f32.mrf.mxu0
        %v881 = vadd.f32 0.0, %v880
        %v882 = vpop.f32.mrf.mxu0
        %v883 = vadd.f32 0.0, %v882
        %884 = vdwg.mxu0
        %885 = vrot.lane.b32.xlu0 %v558, 96
        %v886 = vpop.permute.xlu0 %885
        %887 = vrot.lane.b32.xlu0 %v563, 96
        %v888 = vpop.permute.xlu0 %887
        %v890 = vsel %vm533, %v886, 0
        %v893 = vsel %vm533, %v888, 0
        %895 = vmatpush.bf16.xpose.msra.mxu0 0
        %896 = vmatpush.bf16.xpose.msra.mxu0 0
        %897 = vmatpush.bf16.xpose.msra.mxu0 0
        %898 = vmatpush.bf16.xpose.msra.mxu0 0
        %899 = vmatpush.bf16.xpose.msra.mxu0 0
        %900 = vmatpush.bf16.xpose.msra.mxu0 0
        %901 = vmatpush.bf16.xpose.msra.mxu0 0
        %902 = vmatpush.bf16.xpose.msra.mxu0 %v893
        %903 = vmatmul.bf16.gmra.mxu0 %v890
        %v904 = vpop.f32.mrf.mxu0
        %v905 = vadd.f32 0.0, %v904
        %v906 = vpop.f32.mrf.mxu0
        %v907 = vadd.f32 0.0, %v906
        %908 = vdwg.mxu0
        %909 = vrot.lane.b32.xlu0 %v588, 96
        %v910 = vpop.permute.xlu0 %909
        %911 = vrot.lane.b32.xlu0 %v593, 96
        %v912 = vpop.permute.xlu0 %911
        %v914 = vsel %vm533, %v910, 0
        %v917 = vsel %vm533, %v912, 0
        %919 = vmatpush.bf16.xpose.msra.mxu0 0
        %920 = vmatpush.bf16.xpose.msra.mxu0 0
        %921 = vmatpush.bf16.xpose.msra.mxu0 0
        %922 = vmatpush.bf16.xpose.msra.mxu0 0
        %923 = vmatpush.bf16.xpose.msra.mxu0 0
        %924 = vmatpush.bf16.xpose.msra.mxu0 0
        %925 = vmatpush.bf16.xpose.msra.mxu0 0
        %926 = vmatpush.bf16.xpose.msra.mxu0 %v917
        %927 = vmatmul.bf16.gmra.mxu0 %v914
        %v928 = vpop.f32.mrf.mxu0
        %v929 = vadd.f32 0.0, %v928
        %v930 = vpop.f32.mrf.mxu0
        %v931 = vadd.f32 0.0, %v930
        %932 = vdwg.mxu0
        %933 = vrot.lane.b32.xlu0 %v618, 96
        %v934 = vpop.permute.xlu0 %933
        %935 = vrot.lane.b32.xlu0 %v623, 96
        %v936 = vpop.permute.xlu0 %935
        %v938 = vsel %vm533, %v934, 0
        %v941 = vsel %vm533, %v936, 0
        %943 = vmatpush.bf16.xpose.msra.mxu0 0
        %944 = vmatpush.bf16.xpose.msra.mxu0 0
        %945 = vmatpush.bf16.xpose.msra.mxu0 0
        %946 = vmatpush.bf16.xpose.msra.mxu0 0
        %947 = vmatpush.bf16.xpose.msra.mxu0 0
        %948 = vmatpush.bf16.xpose.msra.mxu0 0
        %949 = vmatpush.bf16.xpose.msra.mxu0 0
        %950 = vmatpush.bf16.xpose.msra.mxu0 %v941
        %951 = vmatmul.bf16.gmra.mxu0 %v938
        %v952 = vpop.f32.mrf.mxu0
        %v953 = vadd.f32 0.0, %v952
        %v954 = vpop.f32.mrf.mxu0
        %v955 = vadd.f32 0.0, %v954
        %956 = vdwg.mxu0
        %v957 = vmul.f32 %v881, 0.17677669
        %v958 = vmul.f32 %v883, 0.17677669
        %v959 = vmul.f32 %v905, 0.17677669
        %v960 = vmul.f32 %v907, 0.17677669
        %v961 = vmul.f32 %v929, 0.17677669
        %v962 = vmul.f32 %v931, 0.17677669
        %v963 = vmul.f32 %v953, 0.17677669
        %v964 = vmul.f32 %v955, 0.17677669
        %v965 = vsel %vm652, %v957, -inf
        %966 = vmax.xlane.f32.xlu0 %v965
        %v967 = vpop.xlane.xlu0 %966
        %v968 = vsel %vm652, %v958, -inf
        %969 = vmax.xlane.f32.xlu0 %v968
        %v970 = vpop.xlane.xlu0 %969
        %v971 = vsel %vm652, %v959, -inf
        %972 = vmax.xlane.f32.xlu0 %v971
        %v973 = vpop.xlane.xlu0 %972
        %v974 = vsel %vm652, %v960, -inf
        %975 = vmax.xlane.f32.xlu0 %v974
        %v976 = vpop.xlane.xlu0 %975
        %v977 = vsel %vm652, %v961, -inf
        %978 = vmax.xlane.f32.xlu0 %v977
        %v979 = vpop.xlane.xlu0 %978
        %v980 = vsel %vm652, %v962, -inf
        %981 = vmax.xlane.f32.xlu0 %v980
        %v982 = vpop.xlane.xlu0 %981
        %v983 = vsel %vm652, %v963, -inf
        %984 = vmax.xlane.f32.xlu0 %v983
        %v985 = vpop.xlane.xlu0 %984
        %v986 = vsel %vm652, %v964, -inf
        %987 = vmax.xlane.f32.xlu0 %v986
        %v988 = vpop.xlane.xlu0 %987
        %v989 = vsub.f32 %v957, %v967
        %v990 = vsub.f32 %v958, %v970
        %v991 = vsub.f32 %v959, %v973
        %v992 = vsub.f32 %v960, %v976
        %v993 = vsub.f32 %v961, %v979
        %v994 = vsub.f32 %v962, %v982
        %v995 = vsub.f32 %v963, %v985
        %v996 = vsub.f32 %v964, %v988
        %v997 = vmul.f32 %v989, 1.442695
        %v998 = vpow.pop %v997
        %v999 = vmul.f32 %v990, 1.442695
        %v1000 = vpow.pop %v999
        %v1001 = vmul.f32 %v991, 1.442695
        %v1002 = vpow.pop %v1001
        %v1003 = vmul.f32 %v992, 1.442695
        %v1004 = vpow.pop %v1003
        %v1005 = vmul.f32 %v993, 1.442695
        %v1006 = vpow.pop %v1005
        %v1007 = vmul.f32 %v994, 1.442695
        %v1008 = vpow.pop %v1007
        %v1009 = vmul.f32 %v995, 1.442695
        %v1010 = vpow.pop %v1009
        %v1011 = vmul.f32 %v996, 1.442695
        %v1012 = vpow.pop %v1011
        %v1013 = vsel %vm652, %v998, 0.0
        %1014 = vadd.xlane.f32.xlu0 %v1013
        %v1015 = vpop.xlane.xlu0 %1014
        %v1016 = vsel %vm652, %v1000, 0.0
        %1017 = vadd.xlane.f32.xlu0 %v1016
        %v1018 = vpop.xlane.xlu0 %1017
        %v1019 = vsel %vm652, %v1002, 0.0
        %1020 = vadd.xlane.f32.xlu0 %v1019
        %v1021 = vpop.xlane.xlu0 %1020
        %v1022 = vsel %vm652, %v1004, 0.0
        %1023 = vadd.xlane.f32.xlu0 %v1022
        %v1024 = vpop.xlane.xlu0 %1023
        %v1025 = vsel %vm652, %v1006, 0.0
        %1026 = vadd.xlane.f32.xlu0 %v1025
        %v1027 = vpop.xlane.xlu0 %1026
        %v1028 = vsel %vm652, %v1008, 0.0
        %1029 = vadd.xlane.f32.xlu0 %v1028
        %v1030 = vpop.xlane.xlu0 %1029
        %v1031 = vsel %vm652, %v1010, 0.0
        %1032 = vadd.xlane.f32.xlu0 %v1031
        %v1033 = vpop.xlane.xlu0 %1032
        %v1034 = vsel %vm652, %v1012, 0.0
        %1035 = vadd.xlane.f32.xlu0 %v1034
        %v1036 = vpop.xlane.xlu0 %1035
        %v1037 = vrcp.pop %v1015
        %v1038 = vrcp.pop %v1018
        %v1039 = vrcp.pop %v1021
        %v1040 = vrcp.pop %v1024
        %v1041 = vrcp.pop %v1027
        %v1042 = vrcp.pop %v1030
        %v1043 = vrcp.pop %v1033
        %v1044 = vrcp.pop %v1036
        %v1045 = vmul.f32 %v998, %v1037
        %v1046 = vmul.f32 %v1000, %v1038
        %v1047 = vmul.f32 %v1002, %v1039
        %v1048 = vmul.f32 %v1004, %v1040
        %v1049 = vmul.f32 %v1006, %v1041
        %v1050 = vmul.f32 %v1008, %v1042
        %v1051 = vmul.f32 %v1010, %v1043
        %v1052 = vmul.f32 %v1012, %v1044
        %v1053 = vpack.c.bf16 %v1045, %v1045
        %v1054 = vpack.c.bf16 %v1046, %v1046
        %v1055 = vpack.c.bf16 %v1047, %v1047
        %v1056 = vpack.c.bf16 %v1048, %v1048
        %v1057 = vpack.c.bf16 %v1049, %v1049
        %v1058 = vpack.c.bf16 %v1050, %v1050
        %v1059 = vpack.c.bf16 %v1051, %v1051
        %v1060 = vpack.c.bf16 %v1052, %v1052
        %v1063 = vunpack.c.l.b16 %v1053
        %v1064 = vunpack.c.l.b16 %v1054
        %v1065 = vpack.c.b16 %v1064, %v1063
        %1066 = vrot.lane.b32.xlu0 %v758, 96
        %v1067 = vpop.permute.xlu0 %1066
        %v1070 = vsel %vm652, %v1065, 0
        %1072 = vmatpush.bf16.msra.mxu0 0
        %1073 = vmatpush.bf16.msra.mxu0 0
        %1074 = vmatpush.bf16.msra.mxu0 0
        %1075 = vmatpush.bf16.msra.mxu0 0
        %1076 = vmatpush.bf16.msra.mxu0 0
        %1077 = vmatpush.bf16.msra.mxu0 0
        %1078 = vmatpush.bf16.msra.mxu0 0
        %1079 = vmatpush.bf16.msra.mxu0 %v1067
        %1080 = vmatmul.bf16.gmra.mxu0 %v1070
        %v1081 = vpop.f32.mrf.mxu0
        %v1082 = vadd.f32 0.0, %v1081
        %v1083 = vpop.f32.mrf.mxu0
        %v1084 = vadd.f32 0.0, %v1083
        %1085 = vdwg.mxu0
        %v1088 = vunpack.c.l.b16 %v1055
        %v1089 = vunpack.c.l.b16 %v1056
        %v1090 = vpack.c.b16 %v1089, %v1088
        %1091 = vrot.lane.b32.xlu0 %v786, 96
        %v1092 = vpop.permute.xlu0 %1091
        %v1095 = vsel %vm652, %v1090, 0
        %1097 = vmatpush.bf16.msra.mxu0 0
        %1098 = vmatpush.bf16.msra.mxu0 0
        %1099 = vmatpush.bf16.msra.mxu0 0
        %1100 = vmatpush.bf16.msra.mxu0 0
        %1101 = vmatpush.bf16.msra.mxu0 0
        %1102 = vmatpush.bf16.msra.mxu0 0
        %1103 = vmatpush.bf16.msra.mxu0 0
        %1104 = vmatpush.bf16.msra.mxu0 %v1092
        %1105 = vmatmul.bf16.gmra.mxu0 %v1095
        %v1106 = vpop.f32.mrf.mxu0
        %v1107 = vadd.f32 0.0, %v1106
        %v1108 = vpop.f32.mrf.mxu0
        %v1109 = vadd.f32 0.0, %v1108
        %1110 = vdwg.mxu0
        %v1113 = vunpack.c.l.b16 %v1057
        %v1114 = vunpack.c.l.b16 %v1058
        %v1115 = vpack.c.b16 %v1114, %v1113
        %1116 = vrot.lane.b32.xlu0 %v814, 96
        %v1117 = vpop.permute.xlu0 %1116
        %v1120 = vsel %vm652, %v1115, 0
        %1122 = vmatpush.bf16.msra.mxu0 0
        %1123 = vmatpush.bf16.msra.mxu0 0
        %1124 = vmatpush.bf16.msra.mxu0 0
        %1125 = vmatpush.bf16.msra.mxu0 0
        %1126 = vmatpush.bf16.msra.mxu0 0
        %1127 = vmatpush.bf16.msra.mxu0 0
        %1128 = vmatpush.bf16.msra.mxu0 0
        %1129 = vmatpush.bf16.msra.mxu0 %v1117
        %1130 = vmatmul.bf16.gmra.mxu0 %v1120
        %v1131 = vpop.f32.mrf.mxu0
        %v1132 = vadd.f32 0.0, %v1131
        %v1133 = vpop.f32.mrf.mxu0
        %v1134 = vadd.f32 0.0, %v1133
        %1135 = vdwg.mxu0
        %v1138 = vunpack.c.l.b16 %v1059
        %v1139 = vunpack.c.l.b16 %v1060
        %v1140 = vpack.c.b16 %v1139, %v1138
        %1141 = vrot.lane.b32.xlu0 %v842, 96
        %v1142 = vpop.permute.xlu0 %1141
        %v1145 = vsel %vm652, %v1140, 0
        %1147 = vmatpush.bf16.msra.mxu0 0
        %1148 = vmatpush.bf16.msra.mxu0 0
        %1149 = vmatpush.bf16.msra.mxu0 0
        %1150 = vmatpush.bf16.msra.mxu0 0
        %1151 = vmatpush.bf16.msra.mxu0 0
        %1152 = vmatpush.bf16.msra.mxu0 0
        %1153 = vmatpush.bf16.msra.mxu0 0
        %1154 = vmatpush.bf16.msra.mxu0 %v1142
        %1155 = vmatmul.bf16.gmra.mxu0 %v1145
        %v1156 = vpop.f32.mrf.mxu0
        %v1157 = vadd.f32 0.0, %v1156
        %v1158 = vpop.f32.mrf.mxu0
        %v1159 = vadd.f32 0.0, %v1158
        %1160 = vdwg.mxu0
        %1161 = vrot.lane.b32.xlu0 %v527, 64
        %v1162 = vpop.permute.xlu0 %1161
        %1163 = vrot.lane.b32.xlu0 %v532, 64
        %v1164 = vpop.permute.xlu0 %1163
        %v1166 = vsel %vm533, %v1162, 0
        %v1169 = vsel %vm533, %v1164, 0
        %1171 = vmatpush.bf16.xpose.msra.mxu0 0
        %1172 = vmatpush.bf16.xpose.msra.mxu0 0
        %1173 = vmatpush.bf16.xpose.msra.mxu0 0
        %1174 = vmatpush.bf16.xpose.msra.mxu0 0
        %1175 = vmatpush.bf16.xpose.msra.mxu0 0
        %1176 = vmatpush.bf16.xpose.msra.mxu0 0
        %1177 = vmatpush.bf16.xpose.msra.mxu0 0
        %1178 = vmatpush.bf16.xpose.msra.mxu0 %v1169
        %1179 = vmatmul.bf16.gmra.mxu0 %v1166
        %v1180 = vpop.f32.mrf.mxu0
        %v1181 = vadd.f32 0.0, %v1180
        %v1182 = vpop.f32.mrf.mxu0
        %v1183 = vadd.f32 0.0, %v1182
        %1184 = vdwg.mxu0
        %1185 = vrot.lane.b32.xlu0 %v558, 64
        %v1186 = vpop.permute.xlu0 %1185
        %1187 = vrot.lane.b32.xlu0 %v563, 64
        %v1188 = vpop.permute.xlu0 %1187
        %v1190 = vsel %vm533, %v1186, 0
        %v1193 = vsel %vm533, %v1188, 0
        %1195 = vmatpush.bf16.xpose.msra.mxu0 0
        %1196 = vmatpush.bf16.xpose.msra.mxu0 0
        %1197 = vmatpush.bf16.xpose.msra.mxu0 0
        %1198 = vmatpush.bf16.xpose.msra.mxu0 0
        %1199 = vmatpush.bf16.xpose.msra.mxu0 0
        %1200 = vmatpush.bf16.xpose.msra.mxu0 0
        %1201 = vmatpush.bf16.xpose.msra.mxu0 0
        %1202 = vmatpush.bf16.xpose.msra.mxu0 %v1193
        %1203 = vmatmul.bf16.gmra.mxu0 %v1190
        %v1204 = vpop.f32.mrf.mxu0
        %v1205 = vadd.f32 0.0, %v1204
        %v1206 = vpop.f32.mrf.mxu0
        %v1207 = vadd.f32 0.0, %v1206
        %1208 = vdwg.mxu0
        %1209 = vrot.lane.b32.xlu0 %v588, 64
        %v1210 = vpop.permute.xlu0 %1209
        %1211 = vrot.lane.b32.xlu0 %v593, 64
        %v1212 = vpop.permute.xlu0 %1211
        %v1214 = vsel %vm533, %v1210, 0
        %v1217 = vsel %vm533, %v1212, 0
        %1219 = vmatpush.bf16.xpose.msra.mxu0 0
        %1220 = vmatpush.bf16.xpose.msra.mxu0 0
        %1221 = vmatpush.bf16.xpose.msra.mxu0 0
        %1222 = vmatpush.bf16.xpose.msra.mxu0 0
        %1223 = vmatpush.bf16.xpose.msra.mxu0 0
        %1224 = vmatpush.bf16.xpose.msra.mxu0 0
        %1225 = vmatpush.bf16.xpose.msra.mxu0 0
        %1226 = vmatpush.bf16.xpose.msra.mxu0 %v1217
        %1227 = vmatmul.bf16.gmra.mxu0 %v1214
        %v1228 = vpop.f32.mrf.mxu0
        %v1229 = vadd.f32 0.0, %v1228
        %v1230 = vpop.f32.mrf.mxu0
        %v1231 = vadd.f32 0.0, %v1230
        %1232 = vdwg.mxu0
        %1233 = vrot.lane.b32.xlu0 %v618, 64
        %v1234 = vpop.permute.xlu0 %1233
        %1235 = vrot.lane.b32.xlu0 %v623, 64
        %v1236 = vpop.permute.xlu0 %1235
        %v1238 = vsel %vm533, %v1234, 0
        %v1241 = vsel %vm533, %v1236, 0
        %1243 = vmatpush.bf16.xpose.msra.mxu0 0
        %1244 = vmatpush.bf16.xpose.msra.mxu0 0
        %1245 = vmatpush.bf16.xpose.msra.mxu0 0
        %1246 = vmatpush.bf16.xpose.msra.mxu0 0
        %1247 = vmatpush.bf16.xpose.msra.mxu0 0
        %1248 = vmatpush.bf16.xpose.msra.mxu0 0
        %1249 = vmatpush.bf16.xpose.msra.mxu0 0
        %1250 = vmatpush.bf16.xpose.msra.mxu0 %v1241
        %1251 = vmatmul.bf16.gmra.mxu0 %v1238
        %v1252 = vpop.f32.mrf.mxu0
        %v1253 = vadd.f32 0.0, %v1252
        %v1254 = vpop.f32.mrf.mxu0
        %v1255 = vadd.f32 0.0, %v1254
        %1256 = vdwg.mxu0
        %v1257 = vmul.f32 %v1181, 0.17677669
        %v1258 = vmul.f32 %v1183, 0.17677669
        %v1259 = vmul.f32 %v1205, 0.17677669
        %v1260 = vmul.f32 %v1207, 0.17677669
        %v1261 = vmul.f32 %v1229, 0.17677669
        %v1262 = vmul.f32 %v1231, 0.17677669
        %v1263 = vmul.f32 %v1253, 0.17677669
        %v1264 = vmul.f32 %v1255, 0.17677669
        %v1265 = vsel %vm652, %v1257, -inf
        %1266 = vmax.xlane.f32.xlu0 %v1265
        %v1267 = vpop.xlane.xlu0 %1266
        %v1268 = vsel %vm652, %v1258, -inf
        %1269 = vmax.xlane.f32.xlu0 %v1268
        %v1270 = vpop.xlane.xlu0 %1269
        %v1271 = vsel %vm652, %v1259, -inf
        %1272 = vmax.xlane.f32.xlu0 %v1271
        %v1273 = vpop.xlane.xlu0 %1272
        %v1274 = vsel %vm652, %v1260, -inf
        %1275 = vmax.xlane.f32.xlu0 %v1274
        %v1276 = vpop.xlane.xlu0 %1275
        %v1277 = vsel %vm652, %v1261, -inf
        %1278 = vmax.xlane.f32.xlu0 %v1277
        %v1279 = vpop.xlane.xlu0 %1278
        %v1280 = vsel %vm652, %v1262, -inf
        %1281 = vmax.xlane.f32.xlu0 %v1280
        %v1282 = vpop.xlane.xlu0 %1281
        %v1283 = vsel %vm652, %v1263, -inf
        %1284 = vmax.xlane.f32.xlu0 %v1283
        %v1285 = vpop.xlane.xlu0 %1284
        %v1286 = vsel %vm652, %v1264, -inf
        %1287 = vmax.xlane.f32.xlu0 %v1286
        %v1288 = vpop.xlane.xlu0 %1287
        %v1289 = vsub.f32 %v1257, %v1267
        %v1290 = vsub.f32 %v1258, %v1270
        %v1291 = vsub.f32 %v1259, %v1273
        %v1292 = vsub.f32 %v1260, %v1276
        %v1293 = vsub.f32 %v1261, %v1279
        %v1294 = vsub.f32 %v1262, %v1282
        %v1295 = vsub.f32 %v1263, %v1285
        %v1296 = vsub.f32 %v1264, %v1288
        %v1297 = vmul.f32 %v1289, 1.442695
        %v1298 = vpow.pop %v1297
        %v1299 = vmul.f32 %v1290, 1.442695
        %v1300 = vpow.pop %v1299
        %v1301 = vmul.f32 %v1291, 1.442695
        %v1302 = vpow.pop %v1301
        %v1303 = vmul.f32 %v1292, 1.442695
        %v1304 = vpow.pop %v1303
        %v1305 = vmul.f32 %v1293, 1.442695
        %v1306 = vpow.pop %v1305
        %v1307 = vmul.f32 %v1294, 1.442695
        %v1308 = vpow.pop %v1307
        %v1309 = vmul.f32 %v1295, 1.442695
        %v1310 = vpow.pop %v1309
        %v1311 = vmul.f32 %v1296, 1.442695
        %v1312 = vpow.pop %v1311
        %v1313 = vsel %vm652, %v1298, 0.0
        %1314 = vadd.xlane.f32.xlu0 %v1313
        %v1315 = vpop.xlane.xlu0 %1314
        %v1316 = vsel %vm652, %v1300, 0.0
        %1317 = vadd.xlane.f32.xlu0 %v1316
        %v1318 = vpop.xlane.xlu0 %1317
        %v1319 = vsel %vm652, %v1302, 0.0
        %1320 = vadd.xlane.f32.xlu0 %v1319
        %v1321 = vpop.xlane.xlu0 %1320
        %v1322 = vsel %vm652, %v1304, 0.0
        %1323 = vadd.xlane.f32.xlu0 %v1322
        %v1324 = vpop.xlane.xlu0 %1323
        %v1325 = vsel %vm652, %v1306, 0.0
        %1326 = vadd.xlane.f32.xlu0 %v1325
        %v1327 = vpop.xlane.xlu0 %1326
        %v1328 = vsel %vm652, %v1308, 0.0
        %1329 = vadd.xlane.f32.xlu0 %v1328
        %v1330 = vpop.xlane.xlu0 %1329
        %v1331 = vsel %vm652, %v1310, 0.0
        %1332 = vadd.xlane.f32.xlu0 %v1331
        %v1333 = vpop.xlane.xlu0 %1332
        %v1334 = vsel %vm652, %v1312, 0.0
        %1335 = vadd.xlane.f32.xlu0 %v1334
        %v1336 = vpop.xlane.xlu0 %1335
        %v1337 = vrcp.pop %v1315
        %v1338 = vrcp.pop %v1318
        %v1339 = vrcp.pop %v1321
        %v1340 = vrcp.pop %v1324
        %v1341 = vrcp.pop %v1327
        %v1342 = vrcp.pop %v1330
        %v1343 = vrcp.pop %v1333
        %v1344 = vrcp.pop %v1336
        %v1345 = vmul.f32 %v1298, %v1337
        %v1346 = vmul.f32 %v1300, %v1338
        %v1347 = vmul.f32 %v1302, %v1339
        %v1348 = vmul.f32 %v1304, %v1340
        %v1349 = vmul.f32 %v1306, %v1341
        %v1350 = vmul.f32 %v1308, %v1342
        %v1351 = vmul.f32 %v1310, %v1343
        %v1352 = vmul.f32 %v1312, %v1344
        %v1353 = vpack.c.bf16 %v1345, %v1345
        %v1354 = vpack.c.bf16 %v1346, %v1346
        %v1355 = vpack.c.bf16 %v1347, %v1347
        %v1356 = vpack.c.bf16 %v1348, %v1348
        %v1357 = vpack.c.bf16 %v1349, %v1349
        %v1358 = vpack.c.bf16 %v1350, %v1350
        %v1359 = vpack.c.bf16 %v1351, %v1351
        %v1360 = vpack.c.bf16 %v1352, %v1352
        %v1363 = vunpack.c.l.b16 %v1353
        %v1364 = vunpack.c.l.b16 %v1354
        %v1365 = vpack.c.b16 %v1364, %v1363
        %1366 = vrot.lane.b32.xlu0 %v758, 64
        %v1367 = vpop.permute.xlu0 %1366
        %v1370 = vsel %vm652, %v1365, 0
        %1372 = vmatpush.bf16.msra.mxu0 0
        %1373 = vmatpush.bf16.msra.mxu0 0
        %1374 = vmatpush.bf16.msra.mxu0 0
        %1375 = vmatpush.bf16.msra.mxu0 0
        %1376 = vmatpush.bf16.msra.mxu0 0
        %1377 = vmatpush.bf16.msra.mxu0 0
        %1378 = vmatpush.bf16.msra.mxu0 0
        %1379 = vmatpush.bf16.msra.mxu0 %v1367
        %1380 = vmatmul.bf16.gmra.mxu0 %v1370
        %v1381 = vpop.f32.mrf.mxu0
        %v1382 = vadd.f32 0.0, %v1381
        %v1383 = vpop.f32.mrf.mxu0
        %v1384 = vadd.f32 0.0, %v1383
        %1385 = vdwg.mxu0
        %v1388 = vunpack.c.l.b16 %v1355
        %v1389 = vunpack.c.l.b16 %v1356
        %v1390 = vpack.c.b16 %v1389, %v1388
        %1391 = vrot.lane.b32.xlu0 %v786, 64
        %v1392 = vpop.permute.xlu0 %1391
        %v1395 = vsel %vm652, %v1390, 0
        %1397 = vmatpush.bf16.msra.mxu0 0
        %1398 = vmatpush.bf16.msra.mxu0 0
        %1399 = vmatpush.bf16.msra.mxu0 0
        %1400 = vmatpush.bf16.msra.mxu0 0
        %1401 = vmatpush.bf16.msra.mxu0 0
        %1402 = vmatpush.bf16.msra.mxu0 0
        %1403 = vmatpush.bf16.msra.mxu0 0
        %1404 = vmatpush.bf16.msra.mxu0 %v1392
        %1405 = vmatmul.bf16.gmra.mxu0 %v1395
        %v1406 = vpop.f32.mrf.mxu0
        %v1407 = vadd.f32 0.0, %v1406
        %v1408 = vpop.f32.mrf.mxu0
        %v1409 = vadd.f32 0.0, %v1408
        %1410 = vdwg.mxu0
        %v1413 = vunpack.c.l.b16 %v1357
        %v1414 = vunpack.c.l.b16 %v1358
        %v1415 = vpack.c.b16 %v1414, %v1413
        %1416 = vrot.lane.b32.xlu0 %v814, 64
        %v1417 = vpop.permute.xlu0 %1416
        %v1420 = vsel %vm652, %v1415, 0
        %1422 = vmatpush.bf16.msra.mxu0 0
        %1423 = vmatpush.bf16.msra.mxu0 0
        %1424 = vmatpush.bf16.msra.mxu0 0
        %1425 = vmatpush.bf16.msra.mxu0 0
        %1426 = vmatpush.bf16.msra.mxu0 0
        %1427 = vmatpush.bf16.msra.mxu0 0
        %1428 = vmatpush.bf16.msra.mxu0 0
        %1429 = vmatpush.bf16.msra.mxu0 %v1417
        %1430 = vmatmul.bf16.gmra.mxu0 %v1420
        %v1431 = vpop.f32.mrf.mxu0
        %v1432 = vadd.f32 0.0, %v1431
        %v1433 = vpop.f32.mrf.mxu0
        %v1434 = vadd.f32 0.0, %v1433
        %1435 = vdwg.mxu0
        %v1438 = vunpack.c.l.b16 %v1359
        %v1439 = vunpack.c.l.b16 %v1360
        %v1440 = vpack.c.b16 %v1439, %v1438
        %1441 = vrot.lane.b32.xlu0 %v842, 64
        %v1442 = vpop.permute.xlu0 %1441
        %v1445 = vsel %vm652, %v1440, 0
        %1447 = vmatpush.bf16.msra.mxu0 0
        %1448 = vmatpush.bf16.msra.mxu0 0
        %1449 = vmatpush.bf16.msra.mxu0 0
        %1450 = vmatpush.bf16.msra.mxu0 0
        %1451 = vmatpush.bf16.msra.mxu0 0
        %1452 = vmatpush.bf16.msra.mxu0 0
        %1453 = vmatpush.bf16.msra.mxu0 0
        %1454 = vmatpush.bf16.msra.mxu0 %v1442
        %1455 = vmatmul.bf16.gmra.mxu0 %v1445
        %v1456 = vpop.f32.mrf.mxu0
        %v1457 = vadd.f32 0.0, %v1456
        %v1458 = vpop.f32.mrf.mxu0
        %v1459 = vadd.f32 0.0, %v1458
        %1460 = vdwg.mxu0
        %1461 = vrot.lane.b32.xlu0 %v527, 32
        %v1462 = vpop.permute.xlu0 %1461
        %1463 = vrot.lane.b32.xlu0 %v532, 32
        %v1464 = vpop.permute.xlu0 %1463
        %v1466 = vsel %vm533, %v1462, 0
        %v1469 = vsel %vm533, %v1464, 0
        %1471 = vmatpush.bf16.xpose.msra.mxu0 0
        %1472 = vmatpush.bf16.xpose.msra.mxu0 0
        %1473 = vmatpush.bf16.xpose.msra.mxu0 0
        %1474 = vmatpush.bf16.xpose.msra.mxu0 0
        %1475 = vmatpush.bf16.xpose.msra.mxu0 0
        %1476 = vmatpush.bf16.xpose.msra.mxu0 0
        %1477 = vmatpush.bf16.xpose.msra.mxu0 0
        %1478 = vmatpush.bf16.xpose.msra.mxu0 %v1469
        %1479 = vmatmul.bf16.gmra.mxu0 %v1466
        %v1480 = vpop.f32.mrf.mxu0
        %v1481 = vadd.f32 0.0, %v1480
        %v1482 = vpop.f32.mrf.mxu0
        %v1483 = vadd.f32 0.0, %v1482
        %1484 = vdwg.mxu0
        %1485 = vrot.lane.b32.xlu0 %v558, 32
        %v1486 = vpop.permute.xlu0 %1485
        %1487 = vrot.lane.b32.xlu0 %v563, 32
        %v1488 = vpop.permute.xlu0 %1487
        %v1490 = vsel %vm533, %v1486, 0
        %v1493 = vsel %vm533, %v1488, 0
        %1495 = vmatpush.bf16.xpose.msra.mxu0 0
        %1496 = vmatpush.bf16.xpose.msra.mxu0 0
        %1497 = vmatpush.bf16.xpose.msra.mxu0 0
        %1498 = vmatpush.bf16.xpose.msra.mxu0 0
        %1499 = vmatpush.bf16.xpose.msra.mxu0 0
        %1500 = vmatpush.bf16.xpose.msra.mxu0 0
        %1501 = vmatpush.bf16.xpose.msra.mxu0 0
        %1502 = vmatpush.bf16.xpose.msra.mxu0 %v1493
        %1503 = vmatmul.bf16.gmra.mxu0 %v1490
        %v1504 = vpop.f32.mrf.mxu0
        %v1505 = vadd.f32 0.0, %v1504
        %v1506 = vpop.f32.mrf.mxu0
        %v1507 = vadd.f32 0.0, %v1506
        %1508 = vdwg.mxu0
        %1509 = vrot.lane.b32.xlu0 %v588, 32
        %v1510 = vpop.permute.xlu0 %1509
        %1511 = vrot.lane.b32.xlu0 %v593, 32
        %v1512 = vpop.permute.xlu0 %1511
        %v1514 = vsel %vm533, %v1510, 0
        %v1517 = vsel %vm533, %v1512, 0
        %1519 = vmatpush.bf16.xpose.msra.mxu0 0
        %1520 = vmatpush.bf16.xpose.msra.mxu0 0
        %1521 = vmatpush.bf16.xpose.msra.mxu0 0
        %1522 = vmatpush.bf16.xpose.msra.mxu0 0
        %1523 = vmatpush.bf16.xpose.msra.mxu0 0
        %1524 = vmatpush.bf16.xpose.msra.mxu0 0
        %1525 = vmatpush.bf16.xpose.msra.mxu0 0
        %1526 = vmatpush.bf16.xpose.msra.mxu0 %v1517
        %1527 = vmatmul.bf16.gmra.mxu0 %v1514
        %v1528 = vpop.f32.mrf.mxu0
        %v1529 = vadd.f32 0.0, %v1528
        %v1530 = vpop.f32.mrf.mxu0
        %v1531 = vadd.f32 0.0, %v1530
        %1532 = vdwg.mxu0
        %1533 = vrot.lane.b32.xlu0 %v618, 32
        %v1534 = vpop.permute.xlu0 %1533
        %1535 = vrot.lane.b32.xlu0 %v623, 32
        %v1536 = vpop.permute.xlu0 %1535
        %v1538 = vsel %vm533, %v1534, 0
        %v1541 = vsel %vm533, %v1536, 0
        %1543 = vmatpush.bf16.xpose.msra.mxu0 0
        %1544 = vmatpush.bf16.xpose.msra.mxu0 0
        %1545 = vmatpush.bf16.xpose.msra.mxu0 0
        %1546 = vmatpush.bf16.xpose.msra.mxu0 0
        %1547 = vmatpush.bf16.xpose.msra.mxu0 0
        %1548 = vmatpush.bf16.xpose.msra.mxu0 0
        %1549 = vmatpush.bf16.xpose.msra.mxu0 0
        %1550 = vmatpush.bf16.xpose.msra.mxu0 %v1541
        %1551 = vmatmul.bf16.gmra.mxu0 %v1538
        %v1552 = vpop.f32.mrf.mxu0
        %v1553 = vadd.f32 0.0, %v1552
        %v1554 = vpop.f32.mrf.mxu0
        %v1555 = vadd.f32 0.0, %v1554
        %1556 = vdwg.mxu0
        %v1557 = vmul.f32 %v1481, 0.17677669
        %v1558 = vmul.f32 %v1483, 0.17677669
        %v1559 = vmul.f32 %v1505, 0.17677669
        %v1560 = vmul.f32 %v1507, 0.17677669
        %v1561 = vmul.f32 %v1529, 0.17677669
        %v1562 = vmul.f32 %v1531, 0.17677669
        %v1563 = vmul.f32 %v1553, 0.17677669
        %v1564 = vmul.f32 %v1555, 0.17677669
        %v1565 = vsel %vm652, %v1557, -inf
        %1566 = vmax.xlane.f32.xlu0 %v1565
        %v1567 = vpop.xlane.xlu0 %1566
        %v1568 = vsel %vm652, %v1558, -inf
        %1569 = vmax.xlane.f32.xlu0 %v1568
        %v1570 = vpop.xlane.xlu0 %1569
        %v1571 = vsel %vm652, %v1559, -inf
        %1572 = vmax.xlane.f32.xlu0 %v1571
        %v1573 = vpop.xlane.xlu0 %1572
        %v1574 = vsel %vm652, %v1560, -inf
        %1575 = vmax.xlane.f32.xlu0 %v1574
        %v1576 = vpop.xlane.xlu0 %1575
        %v1577 = vsel %vm652, %v1561, -inf
        %1578 = vmax.xlane.f32.xlu0 %v1577
        %v1579 = vpop.xlane.xlu0 %1578
        %v1580 = vsel %vm652, %v1562, -inf
        %1581 = vmax.xlane.f32.xlu0 %v1580
        %v1582 = vpop.xlane.xlu0 %1581
        %v1583 = vsel %vm652, %v1563, -inf
        %1584 = vmax.xlane.f32.xlu0 %v1583
        %v1585 = vpop.xlane.xlu0 %1584
        %v1586 = vsel %vm652, %v1564, -inf
        %1587 = vmax.xlane.f32.xlu0 %v1586
        %v1588 = vpop.xlane.xlu0 %1587
        %v1589 = vsub.f32 %v1557, %v1567
        %v1590 = vsub.f32 %v1558, %v1570
        %v1591 = vsub.f32 %v1559, %v1573
        %v1592 = vsub.f32 %v1560, %v1576
        %v1593 = vsub.f32 %v1561, %v1579
        %v1594 = vsub.f32 %v1562, %v1582
        %v1595 = vsub.f32 %v1563, %v1585
        %v1596 = vsub.f32 %v1564, %v1588
        %v1597 = vmul.f32 %v1589, 1.442695
        %v1598 = vpow.pop %v1597
        %v1599 = vmul.f32 %v1590, 1.442695
        %v1600 = vpow.pop %v1599
        %v1601 = vmul.f32 %v1591, 1.442695
        %v1602 = vpow.pop %v1601
        %v1603 = vmul.f32 %v1592, 1.442695
        %v1604 = vpow.pop %v1603
        %v1605 = vmul.f32 %v1593, 1.442695
        %v1606 = vpow.pop %v1605
        %v1607 = vmul.f32 %v1594, 1.442695
        %v1608 = vpow.pop %v1607
        %v1609 = vmul.f32 %v1595, 1.442695
        %v1610 = vpow.pop %v1609
        %v1611 = vmul.f32 %v1596, 1.442695
        %v1612 = vpow.pop %v1611
        %v1613 = vsel %vm652, %v1598, 0.0
        %1614 = vadd.xlane.f32.xlu0 %v1613
        %v1615 = vpop.xlane.xlu0 %1614
        %v1616 = vsel %vm652, %v1600, 0.0
        %1617 = vadd.xlane.f32.xlu0 %v1616
        %v1618 = vpop.xlane.xlu0 %1617
        %v1619 = vsel %vm652, %v1602, 0.0
        %1620 = vadd.xlane.f32.xlu0 %v1619
        %v1621 = vpop.xlane.xlu0 %1620
        %v1622 = vsel %vm652, %v1604, 0.0
        %1623 = vadd.xlane.f32.xlu0 %v1622
        %v1624 = vpop.xlane.xlu0 %1623
        %v1625 = vsel %vm652, %v1606, 0.0
        %1626 = vadd.xlane.f32.xlu0 %v1625
        %v1627 = vpop.xlane.xlu0 %1626
        %v1628 = vsel %vm652, %v1608, 0.0
        %1629 = vadd.xlane.f32.xlu0 %v1628
        %v1630 = vpop.xlane.xlu0 %1629
        %v1631 = vsel %vm652, %v1610, 0.0
        %1632 = vadd.xlane.f32.xlu0 %v1631
        %v1633 = vpop.xlane.xlu0 %1632
        %v1634 = vsel %vm652, %v1612, 0.0
        %1635 = vadd.xlane.f32.xlu0 %v1634
        %v1636 = vpop.xlane.xlu0 %1635
        %v1637 = vrcp.pop %v1615
        %v1638 = vrcp.pop %v1618
        %v1639 = vrcp.pop %v1621
        %v1640 = vrcp.pop %v1624
        %v1641 = vrcp.pop %v1627
        %v1642 = vrcp.pop %v1630
        %v1643 = vrcp.pop %v1633
        %v1644 = vrcp.pop %v1636
        %v1645 = vmul.f32 %v1598, %v1637
        %v1646 = vmul.f32 %v1600, %v1638
        %v1647 = vmul.f32 %v1602, %v1639
        %v1648 = vmul.f32 %v1604, %v1640
        %v1649 = vmul.f32 %v1606, %v1641
        %v1650 = vmul.f32 %v1608, %v1642
        %v1651 = vmul.f32 %v1610, %v1643
        %v1652 = vmul.f32 %v1612, %v1644
        %v1653 = vpack.c.bf16 %v1645, %v1645
        %v1654 = vpack.c.bf16 %v1646, %v1646
        %v1655 = vpack.c.bf16 %v1647, %v1647
        %v1656 = vpack.c.bf16 %v1648, %v1648
        %v1657 = vpack.c.bf16 %v1649, %v1649
        %v1658 = vpack.c.bf16 %v1650, %v1650
        %v1659 = vpack.c.bf16 %v1651, %v1651
        %v1660 = vpack.c.bf16 %v1652, %v1652
        %v1663 = vunpack.c.l.b16 %v1653
        %v1664 = vunpack.c.l.b16 %v1654
        %v1665 = vpack.c.b16 %v1664, %v1663
        %1666 = vrot.lane.b32.xlu0 %v758, 32
        %v1667 = vpop.permute.xlu0 %1666
        %v1670 = vsel %vm652, %v1665, 0
        %1672 = vmatpush.bf16.msra.mxu0 0
        %1673 = vmatpush.bf16.msra.mxu0 0
        %1674 = vmatpush.bf16.msra.mxu0 0
        %1675 = vmatpush.bf16.msra.mxu0 0
        %1676 = vmatpush.bf16.msra.mxu0 0
        %1677 = vmatpush.bf16.msra.mxu0 0
        %1678 = vmatpush.bf16.msra.mxu0 0
        %1679 = vmatpush.bf16.msra.mxu0 %v1667
        %1680 = vmatmul.bf16.gmra.mxu0 %v1670
        %v1681 = vpop.f32.mrf.mxu0
        %v1682 = vadd.f32 0.0, %v1681
        %v1683 = vpop.f32.mrf.mxu0
        %v1684 = vadd.f32 0.0, %v1683
        %1685 = vdwg.mxu0
        %v1688 = vunpack.c.l.b16 %v1655
        %v1689 = vunpack.c.l.b16 %v1656
        %v1690 = vpack.c.b16 %v1689, %v1688
        %1691 = vrot.lane.b32.xlu0 %v786, 32
        %v1692 = vpop.permute.xlu0 %1691
        %v1695 = vsel %vm652, %v1690, 0
        %1697 = vmatpush.bf16.msra.mxu0 0
        %1698 = vmatpush.bf16.msra.mxu0 0
        %1699 = vmatpush.bf16.msra.mxu0 0
        %1700 = vmatpush.bf16.msra.mxu0 0
        %1701 = vmatpush.bf16.msra.mxu0 0
        %1702 = vmatpush.bf16.msra.mxu0 0
        %1703 = vmatpush.bf16.msra.mxu0 0
        %1704 = vmatpush.bf16.msra.mxu0 %v1692
        %1705 = vmatmul.bf16.gmra.mxu0 %v1695
        %v1706 = vpop.f32.mrf.mxu0
        %v1707 = vadd.f32 0.0, %v1706
        %v1708 = vpop.f32.mrf.mxu0
        %v1709 = vadd.f32 0.0, %v1708
        %1710 = vdwg.mxu0
        %v1713 = vunpack.c.l.b16 %v1657
        %v1714 = vunpack.c.l.b16 %v1658
        %v1715 = vpack.c.b16 %v1714, %v1713
        %1716 = vrot.lane.b32.xlu0 %v814, 32
        %v1717 = vpop.permute.xlu0 %1716
        %v1720 = vsel %vm652, %v1715, 0
        %1722 = vmatpush.bf16.msra.mxu0 0
        %1723 = vmatpush.bf16.msra.mxu0 0
        %1724 = vmatpush.bf16.msra.mxu0 0
        %1725 = vmatpush.bf16.msra.mxu0 0
        %1726 = vmatpush.bf16.msra.mxu0 0
        %1727 = vmatpush.bf16.msra.mxu0 0
        %1728 = vmatpush.bf16.msra.mxu0 0
        %1729 = vmatpush.bf16.msra.mxu0 %v1717
        %1730 = vmatmul.bf16.gmra.mxu0 %v1720
        %v1731 = vpop.f32.mrf.mxu0
        %v1732 = vadd.f32 0.0, %v1731
        %v1733 = vpop.f32.mrf.mxu0
        %v1734 = vadd.f32 0.0, %v1733
        %1735 = vdwg.mxu0
        %v1738 = vunpack.c.l.b16 %v1659
        %v1739 = vunpack.c.l.b16 %v1660
        %v1740 = vpack.c.b16 %v1739, %v1738
        %1741 = vrot.lane.b32.xlu0 %v842, 32
        %v1742 = vpop.permute.xlu0 %1741
        %v1745 = vsel %vm652, %v1740, 0
        %1747 = vmatpush.bf16.msra.mxu0 0
        %1748 = vmatpush.bf16.msra.mxu0 0
        %1749 = vmatpush.bf16.msra.mxu0 0
        %1750 = vmatpush.bf16.msra.mxu0 0
        %1751 = vmatpush.bf16.msra.mxu0 0
        %1752 = vmatpush.bf16.msra.mxu0 0
        %1753 = vmatpush.bf16.msra.mxu0 0
        %1754 = vmatpush.bf16.msra.mxu0 %v1742
        %1755 = vmatmul.bf16.gmra.mxu0 %v1745
        %v1756 = vpop.f32.mrf.mxu0
        %v1757 = vadd.f32 0.0, %v1756
        %v1758 = vpop.f32.mrf.mxu0
        %v1759 = vadd.f32 0.0, %v1758
        %1760 = vdwg.mxu0
        %1769 = vrot.lane.b32.xlu0 %v1082, 32
        %v1770 = vpop.permute.xlu0 %1769
        %1771 = vrot.lane.b32.xlu0 %v1084, 32
        %v1772 = vpop.permute.xlu0 %1771
        %1773 = vrot.lane.b32.xlu0 %v1107, 32
        %v1774 = vpop.permute.xlu0 %1773
        %1775 = vrot.lane.b32.xlu0 %v1109, 32
        %v1776 = vpop.permute.xlu0 %1775
        %1777 = vrot.lane.b32.xlu0 %v1132, 32
        %v1778 = vpop.permute.xlu0 %1777
        %1779 = vrot.lane.b32.xlu0 %v1134, 32
        %v1780 = vpop.permute.xlu0 %1779
        %1781 = vrot.lane.b32.xlu0 %v1157, 32
        %v1782 = vpop.permute.xlu0 %1781
        %1783 = vrot.lane.b32.xlu0 %v1159, 32
        %v1784 = vpop.permute.xlu0 %1783
        %1801 = vrot.lane.b32.xlu0 %v1382, 64
        %v1802 = vpop.permute.xlu0 %1801
        %1803 = vrot.lane.b32.xlu0 %v1384, 64
        %v1804 = vpop.permute.xlu0 %1803
        %1805 = vrot.lane.b32.xlu0 %v1407, 64
        %v1806 = vpop.permute.xlu0 %1805
        %1807 = vrot.lane.b32.xlu0 %v1409, 64
        %v1808 = vpop.permute.xlu0 %1807
        %1809 = vrot.lane.b32.xlu0 %v1432, 64
        %v1810 = vpop.permute.xlu0 %1809
        %1811 = vrot.lane.b32.xlu0 %v1434, 64
        %v1812 = vpop.permute.xlu0 %1811
        %1813 = vrot.lane.b32.xlu0 %v1457, 64
        %v1814 = vpop.permute.xlu0 %1813
        %1815 = vrot.lane.b32.xlu0 %v1459, 64
        %v1816 = vpop.permute.xlu0 %1815
        %1833 = vrot.lane.b32.xlu0 %v1682, 96
        %v1834 = vpop.permute.xlu0 %1833
        %1835 = vrot.lane.b32.xlu0 %v1684, 96
        %v1836 = vpop.permute.xlu0 %1835
        %1837 = vrot.lane.b32.xlu0 %v1707, 96
        %v1838 = vpop.permute.xlu0 %1837
        %1839 = vrot.lane.b32.xlu0 %v1709, 96
        %v1840 = vpop.permute.xlu0 %1839
        %1841 = vrot.lane.b32.xlu0 %v1732, 96
        %v1842 = vpop.permute.xlu0 %1841
        %1843 = vrot.lane.b32.xlu0 %v1734, 96
        %v1844 = vpop.permute.xlu0 %1843
        %1845 = vrot.lane.b32.xlu0 %v1757, 96
        %v1846 = vpop.permute.xlu0 %1845
        %1847 = vrot.lane.b32.xlu0 %v1759, 96
        %v1848 = vpop.permute.xlu0 %1847
        %v1857 = vsel %vm533, %v773, %v1770
        %v1858 = vsel %vm533, %v775, %v1772
        %v1859 = vsel %vm533, %v801, %v1774
        %v1860 = vsel %vm533, %v803, %v1776
        %v1861 = vsel %vm533, %v829, %v1778
        %v1862 = vsel %vm533, %v831, %v1780
        %v1863 = vsel %vm533, %v857, %v1782
        %v1864 = vsel %vm533, %v859, %v1784
        %vm1865 = vcmask 523264
        %v1866 = vsel %vm1865, %v1857, %v1802
        %v1867 = vsel %vm1865, %v1858, %v1804
        %v1868 = vsel %vm1865, %v1859, %v1806
        %v1869 = vsel %vm1865, %v1860, %v1808
        %v1870 = vsel %vm1865, %v1861, %v1810
        %v1871 = vsel %vm1865, %v1862, %v1812
        %v1872 = vsel %vm1865, %v1863, %v1814
        %v1873 = vsel %vm1865, %v1864, %v1816
        %vm1874 = vcmask 785408
        %v1875 = vsel %vm1874, %v1866, %v1834
        %v1876 = vsel %vm1874, %v1867, %v1836
        %v1877 = vsel %vm1874, %v1868, %v1838
        %v1878 = vsel %vm1874, %v1869, %v1840
        %v1879 = vsel %vm1874, %v1870, %v1842
        %v1880 = vsel %vm1874, %v1871, %v1844
        %v1881 = vsel %vm1874, %v1872, %v1846
        %v1882 = vsel %vm1874, %v1873, %v1848
        %v1883 = vpack.c.bf16 %v1876, %v1875
        %v1884 = vpack.c.bf16 %v1878, %v1877
        %v1885 = vpack.c.bf16 %v1880, %v1879
        %v1886 = vpack.c.bf16 %v1882, %v1881
        %v1887 = vld [vmem:[#allocation2] sm:$0xf]
        %v1888 = vld [vmem:[#allocation2 + $0x4] sm:$0xf]
        %v1889 = vld [vmem:[#allocation2 + $0x8] sm:$0xf]
        %v1890 = vld [vmem:[#allocation2 + $0xc] sm:$0xf]
        %v1891 = vld [vmem:[#allocation2 + $0x10] sm:$0xf]
        %v1892 = vld [vmem:[#allocation2 + $0x14] sm:$0xf]
        %v1893 = vld [vmem:[#allocation2 + $0x18] sm:$0xf]
        %v1894 = vld [vmem:[#allocation2 + $0x1c] sm:$0xf]
        %v1895 = vld [vmem:[#allocation2 + $0x20] sm:$0xf]
        %v1896 = vld [vmem:[#allocation2 + $0x24] sm:$0xf]
        %v1897 = vld [vmem:[#allocation2 + $0x28] sm:$0xf]
        %v1898 = vld [vmem:[#allocation2 + $0x2c] sm:$0xf]
        %v1899 = vld [vmem:[#allocation2 + $0x30] sm:$0xf]
        %v1900 = vld [vmem:[#allocation2 + $0x34] sm:$0xf]
        %v1901 = vld [vmem:[#allocation2 + $0x38] sm:$0xf]
        %v1902 = vld [vmem:[#allocation2 + $0x3c] sm:$0xf]
        %v1903 = vld [vmem:[%s3] sm:$0x1]
        %v1905 = vperm.slane %v1903, 0
        %v1923 = vunpack.c.l.b16 %v1887
        %v1924 = vunpack.c.l.b16 %v1888
        %v1925 = vunpack.c.l.b16 %v1889
        %v1926 = vunpack.c.l.b16 %v1890
        %v1927 = vunpack.c.l.b16 %v1891
        %v1928 = vunpack.c.l.b16 %v1892
        %v1929 = vunpack.c.l.b16 %v1893
        %v1930 = vunpack.c.l.b16 %v1894
        %v1931 = vunpack.c.l.b16 %v1895
        %v1932 = vunpack.c.l.b16 %v1896
        %v1933 = vunpack.c.l.b16 %v1897
        %v1934 = vunpack.c.l.b16 %v1898
        %v1935 = vunpack.c.l.b16 %v1899
        %v1936 = vunpack.c.l.b16 %v1900
        %v1937 = vunpack.c.l.b16 %v1901
        %v1938 = vunpack.c.l.b16 %v1902
        %v1939 = vpack.c.b16 %v1924, %v1923
        %v1940 = vpack.c.b16 %v1926, %v1925
        %v1941 = vpack.c.b16 %v1928, %v1927
        %v1942 = vpack.c.b16 %v1930, %v1929
        %v1943 = vpack.c.b16 %v1932, %v1931
        %v1944 = vpack.c.b16 %v1934, %v1933
        %v1945 = vpack.c.b16 %v1936, %v1935
        %v1946 = vpack.c.b16 %v1938, %v1937
        %1955 = vmatpush.bf16.msra.mxu0 %v1946
        %1956 = vmatpush.bf16.msra.mxu0 %v1945
        %1957 = vmatpush.bf16.msra.mxu0 %v1944
        %1958 = vmatpush.bf16.msra.mxu0 %v1943
        %1959 = vmatpush.bf16.msra.mxu0 %v1942
        %1960 = vmatpush.bf16.msra.mxu0 %v1941
        %1961 = vmatpush.bf16.msra.mxu0 %v1940
        %1962 = vmatpush.bf16.msra.mxu0 %v1939
        %1963 = vmatmul.bf16.gmra.mxu0 %v1883
        %v1964 = vpop.f32.mrf.mxu0
        %v1965 = vadd.f32 %v1905, %v1964
        %v1966 = vpop.f32.mrf.mxu0
        %v1967 = vadd.f32 %v1905, %v1966
        %1968 = vmatmul.bf16.gmra.mxu0 %v1884
        %v1969 = vpop.f32.mrf.mxu0
        %v1970 = vadd.f32 %v1905, %v1969
        %v1971 = vpop.f32.mrf.mxu0
        %v1972 = vadd.f32 %v1905, %v1971
        %1973 = vmatmul.bf16.gmra.mxu0 %v1885
        %v1974 = vpop.f32.mrf.mxu0
        %v1975 = vadd.f32 %v1905, %v1974
        %v1976 = vpop.f32.mrf.mxu0
        %v1977 = vadd.f32 %v1905, %v1976
        %1978 = vmatmul.bf16.gmra.mxu0 %v1886
        %v1979 = vpop.f32.mrf.mxu0
        %v1980 = vadd.f32 %v1905, %v1979
        %v1981 = vpop.f32.mrf.mxu0
        %v1982 = vadd.f32 %v1905, %v1981
        %1983 = vdwg.mxu0
        %1984 = vst [vmem:[%s210] sm:$0xff] %v1965
        %1985 = vst [vmem:[%s210 + $0x8] sm:$0xff] %v1967
        %1986 = vst [vmem:[%s210 + $0x10] sm:$0xff] %v1970
        %1987 = vst [vmem:[%s210 + $0x18] sm:$0xff] %v1972
        %1988 = vst [vmem:[%s210 + $0x20] sm:$0xff] %v1975
        %1989 = vst [vmem:[%s210 + $0x28] sm:$0xff] %v1977
        %1990 = vst [vmem:[%s210 + $0x30] sm:$0xff] %v1980
        %1991 = vst [vmem:[%s210 + $0x38] sm:$0xff] %v1982
        %s1992 = sand.u32 %s116, 1
        %s1993 = scalar_lea.sflag [#allocation4], %s1992
        %s1994 = sand.u32 %s116, 1
        %s1995 = smul.addr %s1994, 64
        %s1996 = scalar_lea.vmem [#allocation5], %s1995
        // Predicated region
        $region41: #{attention_forward.1} parent=35 // pred_check
          %p1997 = pneg %p126
        $region42: #{attention_forward.1} parent=35 // pred_check_branch
          %1999 = sbr.rel (%p1997) target = $region44
        $region43: #{attention_forward.1} parent=35 // pred_region
          %s2000 = smul.u32 4, %s19
          %2002 = vsyncadd %s1993, 0
          %s2003 = smul.addr %s2000, 2
          %s2004 = smul.addr %s2003, 8
          %s2005 = scalar_lea.hbm %s4, %s2004
          %s2006 = sshll.u32 %s1996, 4
          %s2007 = int_to_ptr.vmem [resolvable:$true] %s2006
          %s2008 = sshll.u32 %s2005, 4
          %s2009 = int_to_ptr.hbm [resolvable:$true] %s2008
          %2014 = dma.vmem_to_hbm [thread:$0]  %s2007, 1024, %s2009, %s1993, 128, 128, 8
        $region44: #{attention_forward.1} parent=35 // pred_fallthru
          _
      $region36: #{attention_forward.1} parent=5 // pred_fallthru
        _
      %p2015 = scmp.le.s32.totalorder 2, %s14
      // Predicated region
      $region45: #{attention_forward.1} parent=5 // pred_check
        %p2016 = pneg %p2015
      $region46: #{attention_forward.1} parent=5 // pred_check_branch
        %2018 = sbr.rel (%p2016) target = $region48
      $region47: #{attention_forward.1} parent=5 // pred_region
        %s2019 = ssub.s32 %s14, 2
        // Predicated region
        $region49: #{attention_forward.1} parent=47 // pred_check
          %p2020 = pneg %p132
        $region50: #{attention_forward.1} parent=47 // pred_check_branch
          %2022 = sbr.rel (%p2020) target = $region52
        $region51: #{attention_forward.1} parent=47 // pred_region
          %s2023 = sand.u32 %s117, 1
          %s2024 = scalar_lea.sflag [#allocation4], %s2023
          %s2025 = sand.u32 %s117, 1
          %s2026 = smul.addr %s2025, 64
          %s2027 = scalar_lea.vmem [#allocation5], %s2026
          %2029 = dma.done %s2024, 1024
        $region52: #{attention_forward.1} parent=47 // pred_fallthru
          _
      $region48: #{attention_forward.1} parent=5 // pred_fallthru
        _
    $region6: #{attention_forward.1} parent=1 // loop_footer
      %s18 = sadd.s32 1, %s14
    $region7: #{attention_forward.1} parent=1 // loop_footer_branch
      %13 = sbr.rel target = $region3
    $region8: #{attention_forward.1} parent=1 // loop_exit
      _
    %2030 = vsyncpa [#allocation3], 1
    %s2031 = scalar_lea.sflag [#allocation3], 1
    %2032 = vsyncpa %s2031, 1
    %2033 = vsyncpa [#allocation4], 1
    %s2034 = scalar_lea.sflag [#allocation4], 1
    %2035 = vsyncpa %s2034, 1

</llo_original>
